<compile_context>
chip_gen: v5e
topology: v5e:2x2
jax: 0.10.0
libtpu: 0.0.40
codegen_flags: <defaults>
</compile_context>

<pallas_src>
import jax
import jax.numpy as jnp
from jax.experimental import pallas as pl
from jax.experimental.pallas import tpu as pltpu

IN_FEATURES = 28 * 28          # 784
IN_PAD = 896                   # 7 * 128 (zero-padded K for the first matmul)
HIDDEN = 512
OUT_FEATURES = 10
OUT_PAD = 128                  # lane-dense output width (zero-padded logit columns)

_TILE_CANDIDATES = (512, 256, 128, 64, 32, 16)


def _round_up(n, m):
    return ((n + m - 1) // m) * m


def _choose_tile(B):
    """Pick the batch tile TM (multiple of 16 for bf16 sublane packing) and padded Bp.

    Prefers >= 2 grid steps (so v7x can shard the 'parallel' batch axis across both
    TensorCores) while bounding batch-padding waste; falls back to the largest tile
    with acceptable padding, then to the minimal 16-row tile.
    """
    waste_budget = max(B // 8, 15)
    for tm in _TILE_CANDIDATES:
        Bp = _round_up(B, tm)
        if Bp // tm >= 2 and Bp - B <= waste_budget:
            return tm, Bp
    for tm in _TILE_CANDIDATES:
        Bp = _round_up(B, tm)
        if Bp - B <= waste_budget:
            return tm, Bp
    return 16, _round_up(B, 16)


def mlp_kernel(x_ref, w1_ref, b1_ref, w2_ref, b2_ref, w3_ref, b3_ref, o_ref):
    # x_ref: (TM, IN_PAD) bf16
    # w1: (IN_PAD, 512) bf16   b1: (1, 512) f32
    # w2: (512, 512)    bf16   b2: (1, 512) f32
    # w3: (512, OUT_PAD) bf16  b3: (1, OUT_PAD) f32
    # o_ref: (TM, OUT_PAD) f32
    x = x_ref[...]

    h1 = jnp.dot(x, w1_ref[...], preferred_element_type=jnp.float32) + b1_ref[...]
    h1 = jnp.maximum(h1, 0.0).astype(jnp.bfloat16)

    h2 = jnp.dot(h1, w2_ref[...], preferred_element_type=jnp.float32) + b2_ref[...]
    h2 = jnp.maximum(h2, 0.0).astype(jnp.bfloat16)

    logits = jnp.dot(h2, w3_ref[...], preferred_element_type=jnp.float32) + b3_ref[...]
    o_ref[...] = logits.astype(o_ref.dtype)


def prepare_params(params):
    """One-time weight prep (bf16 cast + zero-pad), hoisted out of the forward pass."""
    w1, b1, w2, b2, w3, b3 = params
    w1p = jnp.pad(w1.astype(jnp.bfloat16), ((0, IN_PAD - IN_FEATURES), (0, 0)))
    w2p = w2.astype(jnp.bfloat16)
    w3p = jnp.pad(w3.astype(jnp.bfloat16), ((0, 0), (0, OUT_PAD - OUT_FEATURES)))
    b1p = b1.astype(jnp.float32).reshape(1, HIDDEN)
    b2p = b2.astype(jnp.float32).reshape(1, HIDDEN)
    b3p = jnp.pad(b3.astype(jnp.float32).reshape(1, OUT_FEATURES),
                  ((0, 0), (0, OUT_PAD - OUT_FEATURES)))
    return (w1p, b1p, w2p, b2p, w3p, b3p)


@jax.jit
def neural_network_forward(x_nchw, prepared_params):
    """x_nchw: (B, 1, 28, 28) float32 (NCHW, like PyTorch). Returns (B, 10) f32 logits."""
    w1p, b1p, w2p, b2p, w3p, b3p = prepared_params
    B = x_nchw.shape[0]

    # nn.Flatten(): flatten all dims after batch, row-major.
    # Cast to bf16 BEFORE padding so the padded activation buffer is written once, in bf16.
    x = x_nchw.reshape(B, -1).astype(jnp.bfloat16)
    assert x.shape[1] == IN_FEATURES

    TM, Bp = _choose_tile(B)
    x = jnp.pad(x, ((0, Bp - B), (0, IN_PAD - IN_FEATURES)))

    n_steps = Bp // TM
    grid = (n_steps,)

    # x tile is pipelined over the batch; 3-deep buffering hides DMA jitter (v6e)
    # once the grid is long enough to benefit from it.
    if n_steps >= 3:
        x_spec = pl.BlockSpec((TM, IN_PAD), lambda i: (i, 0),
                              pipeline_mode=pl.Buffered(3))
    else:
        x_spec = pl.BlockSpec((TM, IN_PAD), lambda i: (i, 0))

    # Weights/biases: constant index_map -> DMA'd once, VMEM-resident across the grid.
    resident = lambda shape: pl.BlockSpec(shape, lambda i: (0,) * len(shape))

    flops = 2 * Bp * (IN_PAD * HIDDEN + HIDDEN * HIDDEN + HIDDEN * OUT_PAD)
    bytes_accessed = (
        Bp * IN_PAD * 2                                                 # x (bf16)
        + (IN_PAD * HIDDEN + HIDDEN * HIDDEN + HIDDEN * OUT_PAD) * 2    # weights (bf16)
        + (HIDDEN + HIDDEN + OUT_PAD) * 4                               # biases (f32)
        + Bp * OUT_PAD * 4                                              # output (f32)
    )

    out = pl.pallas_call(
        mlp_kernel,
        out_shape=jax.ShapeDtypeStruct((Bp, OUT_PAD), jnp.float32),
        grid=grid,
        in_specs=[
            x_spec,
            resident((IN_PAD, HIDDEN)),
            resident((1, HIDDEN)),
            resident((HIDDEN, HIDDEN)),
            resident((1, HIDDEN)),
            resident((HIDDEN, OUT_PAD)),
            resident((1, OUT_PAD)),
        ],
        out_specs=pl.BlockSpec((TM, OUT_PAD), lambda i: (i, 0)),
        compiler_params=pltpu.CompilerParams(
            dimension_semantics=("parallel",),
        ),
        cost_estimate=pl.CostEstimate(
            flops=flops, transcendentals=0, bytes_accessed=bytes_accessed),
    )(x, w1p, b1p, w2p, b2p, w3p, b3p)

    # Strip batch padding and the lane-padded logit columns (fuses under jit).
    return out[:B, :OUT_FEATURES]


def init_params(key):
    """Deterministic init matching torch.nn.Linear default (uniform +/- 1/sqrt(fan_in))."""
    ks = jax.random.split(key, 6)

    def linear(kw, kb, fan_in, fan_out):
        bound = 1.0 / jnp.sqrt(fan_in)
        w = jax.random.uniform(kw, (fan_in, fan_out), jnp.float32, -bound, bound)
        b = jax.random.uniform(kb, (1, fan_out), jnp.float32, -bound, bound)
        return w, b

    w1, b1 = linear(ks[0], ks[1], IN_FEATURES, HIDDEN)
    w2, b2 = linear(ks[2], ks[3], HIDDEN, HIDDEN)
    w3, b3 = linear(ks[4], ks[5], HIDDEN, OUT_FEATURES)
    return (w1, b1, w2, b2, w3, b3)


def reference_forward(x_nchw, params):
    """Pure-JAX reference with the same bf16-weights / f32-accumulation numerics."""
    w1, b1, w2, b2, w3, b3 = params
    x = x_nchw.reshape(x_nchw.shape[0], -1).astype(jnp.bfloat16)
    h1 = jnp.maximum(
        jnp.dot(x, w1.astype(jnp.bfloat16), preferred_element_type=jnp.float32) + b1, 0.0
    ).astype(jnp.bfloat16)
    h2 = jnp.maximum(
        jnp.dot(h1, w2.astype(jnp.bfloat16), preferred_element_type=jnp.float32) + b2, 0.0
    ).astype(jnp.bfloat16)
    return jnp.dot(h2, w3.astype(jnp.bfloat16), preferred_element_type=jnp.float32) + b3


if __name__ == "__main__":
    key = jax.random.PRNGKey(0)
    k_x, k_p = jax.random.split(key)

    B = 8
    x = jax.random.normal(k_x, (B, 1, 28, 28), jnp.float32)  # NCHW like PyTorch
    params = init_params(k_p)
    prepared = prepare_params(params)           # one-time weight pad/cast (hoisted)

    logits = neural_network_forward(x, prepared)
    logits = jax.block_until_ready(logits)

    ref = reference_forward(x, params)
    assert logits.shape == (B, OUT_FEATURES)
    assert jnp.allclose(logits, ref, atol=1e-2, rtol=1e-2), "mismatch vs pure-JAX reference"

    print("KERNEL_OK")
</pallas_src>

<mosaic_0001>
module attributes {stable_mosaic.version = 11 : i64} {
  func.func @mlp_kernel(%arg0: i32, %arg1: memref<16x896xbf16, #tpu.memory_space<vmem>>, %arg2: memref<896x512xbf16, #tpu.memory_space<vmem>>, %arg3: memref<1x512xf32, #tpu.memory_space<vmem>>, %arg4: memref<512x512xbf16, #tpu.memory_space<vmem>>, %arg5: memref<1x512xf32, #tpu.memory_space<vmem>>, %arg6: memref<512x128xbf16, #tpu.memory_space<vmem>>, %arg7: memref<1x128xf32, #tpu.memory_space<vmem>>, %arg8: memref<16x128xf32, #tpu.memory_space<vmem>>) attributes {dimension_semantics = [#tpu.dimension_semantics<parallel>], iteration_bounds = array<i64: 1>, scalar_prefetch = 0 : i64, scratch_operands = 0 : i64, tpu.core_type = #tpu.core_type<tc>, window_params = [{transform_indices = @transform_0, window_bounds = array<i64: 16, 896>}, {pipeline_mode = #tpu.pipeline_mode<synchronous>, transform_indices = @transform_1, window_bounds = array<i64: 896, 512>}, {pipeline_mode = #tpu.pipeline_mode<synchronous>, transform_indices = @transform_2, window_bounds = array<i64: 1, 512>}, {pipeline_mode = #tpu.pipeline_mode<synchronous>, transform_indices = @transform_3, window_bounds = array<i64: 512, 512>}, {pipeline_mode = #tpu.pipeline_mode<synchronous>, transform_indices = @transform_4, window_bounds = array<i64: 1, 512>}, {pipeline_mode = #tpu.pipeline_mode<synchronous>, transform_indices = @transform_5, window_bounds = array<i64: 512, 128>}, {pipeline_mode = #tpu.pipeline_mode<synchronous>, transform_indices = @transform_6, window_bounds = array<i64: 1, 128>}, {transform_indices = @transform_7, window_bounds = array<i64: 16, 128>}]} {
    %c0 = arith.constant 0 : index
    %c0_0 = arith.constant 0 : index
    %0 = vector.load %arg1[%c0, %c0_0] : memref<16x896xbf16, #tpu.memory_space<vmem>>, vector<16x896xbf16>
    %c0_1 = arith.constant 0 : index
    %c0_2 = arith.constant 0 : index
    %1 = vector.load %arg2[%c0_1, %c0_2] : memref<896x512xbf16, #tpu.memory_space<vmem>>, vector<896x512xbf16>
    %cst = arith.constant dense<0.000000e+00> : vector<16x512xf32>
    %2 = tpu.matmul %0, %1, %cst {dimension_numbers = #tpu.dot_dimension_numbers<[1], [0], [0], [1], [0, 0, 1, 1], [], []>} : vector<16x896xbf16>, vector<896x512xbf16>, vector<16x512xf32> -> vector<16x512xf32>
    %c0_3 = arith.constant 0 : index
    %c0_4 = arith.constant 0 : index
    %3 = vector.load %arg3[%c0_3, %c0_4] : memref<1x512xf32, #tpu.memory_space<vmem>>, vector<1x512xf32>
    %4 = vector.broadcast %3 : vector<1x512xf32> to vector<16x512xf32>
    %5 = arith.addf %2, %4 : vector<16x512xf32>
    %cst_5 = arith.constant 0.000000e+00 : f32
    %6 = vector.broadcast %cst_5 : f32 to vector<16x512xf32>
    %7 = arith.maximumf %5, %6 : vector<16x512xf32>
    %8 = arith.truncf %7 : vector<16x512xf32> to vector<16x512xbf16>
    %c0_6 = arith.constant 0 : index
    %c0_7 = arith.constant 0 : index
    %9 = vector.load %arg4[%c0_6, %c0_7] : memref<512x512xbf16, #tpu.memory_space<vmem>>, vector<512x512xbf16>
    %cst_8 = arith.constant dense<0.000000e+00> : vector<16x512xf32>
    %10 = tpu.matmul %8, %9, %cst_8 {dimension_numbers = #tpu.dot_dimension_numbers<[1], [0], [0], [1], [0, 0, 1, 1], [], []>} : vector<16x512xbf16>, vector<512x512xbf16>, vector<16x512xf32> -> vector<16x512xf32>
    %c0_9 = arith.constant 0 : index
    %c0_10 = arith.constant 0 : index
    %11 = vector.load %arg5[%c0_9, %c0_10] : memref<1x512xf32, #tpu.memory_space<vmem>>, vector<1x512xf32>
    %12 = vector.broadcast %11 : vector<1x512xf32> to vector<16x512xf32>
    %13 = arith.addf %10, %12 : vector<16x512xf32>
    %cst_11 = arith.constant 0.000000e+00 : f32
    %14 = vector.broadcast %cst_11 : f32 to vector<16x512xf32>
    %15 = arith.maximumf %13, %14 : vector<16x512xf32>
    %16 = arith.truncf %15 : vector<16x512xf32> to vector<16x512xbf16>
    %c0_12 = arith.constant 0 : index
    %c0_13 = arith.constant 0 : index
    %17 = vector.load %arg6[%c0_12, %c0_13] : memref<512x128xbf16, #tpu.memory_space<vmem>>, vector<512x128xbf16>
    %cst_14 = arith.constant dense<0.000000e+00> : vector<16x128xf32>
    %18 = tpu.matmul %16, %17, %cst_14 {dimension_numbers = #tpu.dot_dimension_numbers<[1], [0], [0], [1], [0, 0, 1, 1], [], []>} : vector<16x512xbf16>, vector<512x128xbf16>, vector<16x128xf32> -> vector<16x128xf32>
    %c0_15 = arith.constant 0 : index
    %c0_16 = arith.constant 0 : index
    %19 = vector.load %arg7[%c0_15, %c0_16] : memref<1x128xf32, #tpu.memory_space<vmem>>, vector<1x128xf32>
    %20 = vector.broadcast %19 : vector<1x128xf32> to vector<16x128xf32>
    %21 = arith.addf %18, %20 : vector<16x128xf32>
    %c0_17 = arith.constant 0 : index
    %c0_18 = arith.constant 0 : index
    %22 = vector.load %arg8[%c0_17, %c0_18] : memref<16x128xf32, #tpu.memory_space<vmem>>, vector<16x128xf32>
    tpu.vector_store %arg8[%c0_17, %c0_18], %21 {strides = array<i32>} : memref<16x128xf32, #tpu.memory_space<vmem>>, vector<16x128xf32>,
    return
  }
  func.func @transform_0(%arg0: i32) -> (i32, i32) {
    %c0_i32 = arith.constant 0 : i32
    %c0_i32_0 = arith.constant 0 : i32
    return %arg0, %c0_i32 : i32, i32
  }
  func.func @transform_1(%arg0: i32) -> (i32, i32) {
    %c0_i32 = arith.constant 0 : i32
    %c0_i32_0 = arith.constant 0 : i32
    %c0_i32_1 = arith.constant 0 : i32
    return %c0_i32, %c0_i32_0 : i32, i32
  }
  func.func @transform_2(%arg0: i32) -> (i32, i32) {
    %c0_i32 = arith.constant 0 : i32
    %c0_i32_0 = arith.constant 0 : i32
    %c0_i32_1 = arith.constant 0 : i32
    return %c0_i32, %c0_i32_0 : i32, i32
  }
  func.func @transform_3(%arg0: i32) -> (i32, i32) {
    %c0_i32 = arith.constant 0 : i32
    %c0_i32_0 = arith.constant 0 : i32
    %c0_i32_1 = arith.constant 0 : i32
    return %c0_i32, %c0_i32_0 : i32, i32
  }
  func.func @transform_4(%arg0: i32) -> (i32, i32) {
    %c0_i32 = arith.constant 0 : i32
    %c0_i32_0 = arith.constant 0 : i32
    %c0_i32_1 = arith.constant 0 : i32
    return %c0_i32, %c0_i32_0 : i32, i32
  }
  func.func @transform_5(%arg0: i32) -> (i32, i32) {
    %c0_i32 = arith.constant 0 : i32
    %c0_i32_0 = arith.constant 0 : i32
    %c0_i32_1 = arith.constant 0 : i32
    return %c0_i32, %c0_i32_0 : i32, i32
  }
  func.func @transform_6(%arg0: i32) -> (i32, i32) {
    %c0_i32 = arith.constant 0 : i32
    %c0_i32_0 = arith.constant 0 : i32
    %c0_i32_1 = arith.constant 0 : i32
    return %c0_i32, %c0_i32_0 : i32, i32
  }
  func.func @transform_7(%arg0: i32) -> (i32, i32) {
    %c0_i32 = arith.constant 0 : i32
    %c0_i32_0 = arith.constant 0 : i32
    return %arg0, %c0_i32 : i32, i32
  }
}

</mosaic_0001>

<llo_original>
// kernel: neural_network_forward.1
$region0: #{neural_network_forward.1}
  #allocation0 [shape = 'u32[]', space=smem, size = 0x4, offset = 0x4, fixed_abs, tag = 'smem constant byte address 0x4 - core index']
  #allocation1 [shape = 'u32[72,128]{1,0:T(1,128)}', space=vmem, size = 0x9000, scoped, tag = 'internal scratch']
  %s0 = inlined_call_operand.vmem [shape: bf16[16,896], index: 0, kind: input, shape index: {}]
  %s1 = inlined_call_operand.hbm [shape: bf16[896,512], index: 1, kind: input, shape index: {}]
  %s2 = inlined_call_operand.vmem [shape: f32[1,512], index: 2, kind: input, shape index: {}]
  %s3 = inlined_call_operand.hbm [shape: bf16[512,512], index: 3, kind: input, shape index: {}]
  %s4 = inlined_call_operand.vmem [shape: f32[1,512], index: 4, kind: input, shape index: {}]
  %s5 = inlined_call_operand.vmem [shape: bf16[512,128], index: 5, kind: input, shape index: {}]
  %s6 = inlined_call_operand.vmem [shape: f32[1,128], index: 6, kind: input, shape index: {}]
  %s7 = inlined_call_operand.vmem [shape: f32[16,128], index: 7, kind: output, shape index: {}]
  %s8 = sld [smem:[#allocation0]]
  $region46: #{neural_network_forward.1} parent=0
    _
  %s10 = ssub.s32 1, %s8
  %s11 = scalar_select 0, %s10, %s8
  $region1: #{neural_network_forward.1} parent=0
    #allocation2 [shape = 'u8[917504]{0}', space=vmem, size = 0xe0000, scoped, tag = 'input window, operand 1, single buffered']
    #allocation3 [shape = 's32[1]{0}', space=sflag, size = 0x4, scoped, tag = 'scoped memory for neural_network_forward.1']
    #allocation4 [shape = 'u8[524288]{0}', space=vmem, size = 0x80000, scoped, tag = 'input window, operand 3, single buffered']
    #allocation5 [shape = 's32[1]{0}', space=sflag, size = 0x4, scoped, tag = 'scoped memory for neural_network_forward.1']
    %12 = vsyncpa [#allocation3], 0
    %13 = vsyncpa [#allocation5], 0
    // Predicated region
    $region2: #{neural_network_forward.1} parent=1 // pred_check
      _
    $region3: #{neural_network_forward.1} parent=1 // pred_check_branch
      %15 = sbr.rel (0) target = $region5
    $region4: #{neural_network_forward.1} parent=1 // pred_region
      _
    $region5: #{neural_network_forward.1} parent=1 // pred_fallthru
      _
    // Predicated region
    $region6: #{neural_network_forward.1} parent=1 // pred_check
      _
    $region7: #{neural_network_forward.1} parent=1 // pred_check_branch
      %17 = sbr.rel (0) target = $region9
    $region8: #{neural_network_forward.1} parent=1 // pred_region
      %19 = vsyncadd [#allocation3], 0
      %s20 = sshll.u32 %s1, 4
      %s21 = int_to_ptr.hbm [resolvable:$true] %s20
      %s22 = sshll.u32 [#allocation2], 4
      %s23 = int_to_ptr.vmem [resolvable:$true] %s22
      %28 = dma.hbm_to_vmem [thread:$0]  %s21, 28672, %s23, [#allocation3], 256, 256, 16
    $region9: #{neural_network_forward.1} parent=1 // pred_fallthru
      _
    // Predicated region
    $region10: #{neural_network_forward.1} parent=1 // pred_check
      _
    $region11: #{neural_network_forward.1} parent=1 // pred_check_branch
      %30 = sbr.rel (0) target = $region13
    $region12: #{neural_network_forward.1} parent=1 // pred_region
      _
    $region13: #{neural_network_forward.1} parent=1 // pred_fallthru
      _
    // Predicated region
    $region14: #{neural_network_forward.1} parent=1 // pred_check
      _
    $region15: #{neural_network_forward.1} parent=1 // pred_check_branch
      %32 = sbr.rel (0) target = $region17
    $region16: #{neural_network_forward.1} parent=1 // pred_region
      %34 = vsyncadd [#allocation5], 0
      %s35 = sshll.u32 %s3, 4
      %s36 = int_to_ptr.hbm [resolvable:$true] %s35
      %s37 = sshll.u32 [#allocation4], 4
      %s38 = int_to_ptr.vmem [resolvable:$true] %s37
      %43 = dma.hbm_to_vmem [thread:$0]  %s36, 16384, %s38, [#allocation5], 256, 256, 16
    $region17: #{neural_network_forward.1} parent=1 // pred_fallthru
      _
    // Predicated region
    $region18: #{neural_network_forward.1} parent=1 // pred_check
      _
    $region19: #{neural_network_forward.1} parent=1 // pred_check_branch
      %45 = sbr.rel (0) target = $region21
    $region20: #{neural_network_forward.1} parent=1 // pred_region
      _
    $region21: #{neural_network_forward.1} parent=1 // pred_fallthru
      _
    // Predicated region
    $region22: #{neural_network_forward.1} parent=1 // pred_check
      _
    $region23: #{neural_network_forward.1} parent=1 // pred_check_branch
      %47 = sbr.rel (0) target = $region25
    $region24: #{neural_network_forward.1} parent=1 // pred_region
      _
    $region25: #{neural_network_forward.1} parent=1 // pred_fallthru
      _
    // Predicated region
    $region26: #{neural_network_forward.1} parent=1 // pred_check
      _
    $region27: #{neural_network_forward.1} parent=1 // pred_check_branch
      %49 = sbr.rel (0) target = $region29
    $region28: #{neural_network_forward.1} parent=1 // pred_region
      _
    $region29: #{neural_network_forward.1} parent=1 // pred_fallthru
      _
    // Predicated region
    $region30: #{neural_network_forward.1} parent=1 // pred_check
      _
    $region31: #{neural_network_forward.1} parent=1 // pred_check_branch
      %51 = sbr.rel (0) target = $region33
    $region32: #{neural_network_forward.1} parent=1 // pred_region
      %53 = dma.done [#allocation3], 28672
    $region33: #{neural_network_forward.1} parent=1 // pred_fallthru
      _
    // Predicated region
    $region34: #{neural_network_forward.1} parent=1 // pred_check
      _
    $region35: #{neural_network_forward.1} parent=1 // pred_check_branch
      %55 = sbr.rel (0) target = $region37
    $region36: #{neural_network_forward.1} parent=1 // pred_region
      %57 = dma.done [#allocation5], 16384
    $region37: #{neural_network_forward.1} parent=1 // pred_fallthru
      _
    %v58 = vld [vmem:[%s0] sm:$0xff]
    %v59 = vld [vmem:[%s0 + $0x8] sm:$0xff]
    %v60 = vld [vmem:[%s0 + $0x10] sm:$0xff]
    %v61 = vld [vmem:[%s0 + $0x18] sm:$0xf]
    %v62 = vld [vmem:[%s0 + $0x1c] sm:$0xff]
    %v63 = vld [vmem:[%s0 + $0x24] sm:$0xff]
    %v64 = vld [vmem:[%s0 + $0x2c] sm:$0xff]
    %v65 = vld [vmem:[%s0 + $0x34] sm:$0xf]
    %v66 = vld [vmem:[#allocation2] sm:$0xff]
    %v67 = vld [vmem:[#allocation2 + $0x8] sm:$0xff]
    %v68 = vld [vmem:[#allocation2 + $0x10] sm:$0xff]
    %v69 = vld [vmem:[#allocation2 + $0x18] sm:$0xff]
    %v70 = vld [vmem:[#allocation2 + $0x20] sm:$0xff]
    %v71 = vld [vmem:[#allocation2 + $0x28] sm:$0xff]
    %v72 = vld [vmem:[#allocation2 + $0x30] sm:$0xff]
    %v73 = vld [vmem:[#allocation2 + $0x38] sm:$0xff]
    %v74 = vld [vmem:[#allocation2 + $0x40] sm:$0xff]
    %v75 = vld [vmem:[#allocation2 + $0x48] sm:$0xff]
    %v76 = vld [vmem:[#allocation2 + $0x50] sm:$0xff]
    %v77 = vld [vmem:[#allocation2 + $0x58] sm:$0xff]
    %v78 = vld [vmem:[#allocation2 + $0x60] sm:$0xff]
    %v79 = vld [vmem:[#allocation2 + $0x68] sm:$0xff]
    %v80 = vld [vmem:[#allocation2 + $0x70] sm:$0xff]
    %v81 = vld [vmem:[#allocation2 + $0x78] sm:$0xff]
    %v82 = vld [vmem:[#allocation2 + $0x80] sm:$0xff]
    %v83 = vld [vmem:[#allocation2 + $0x88] sm:$0xff]
    %v84 = vld [vmem:[#allocation2 + $0x90] sm:$0xff]
    %v85 = vld [vmem:[#allocation2 + $0x98] sm:$0xff]
    %v86 = vld [vmem:[#allocation2 + $0xa0] sm:$0xff]
    %v87 = vld [vmem:[#allocation2 + $0xa8] sm:$0xff]
    %v88 = vld [vmem:[#allocation2 + $0xb0] sm:$0xff]
    %v89 = vld [vmem:[#allocation2 + $0xb8] sm:$0xff]
    %v90 = vld [vmem:[#allocation2 + $0xc0] sm:$0xff]
    %v91 = vld [vmem:[#allocation2 + $0xc8] sm:$0xff]
    %v92 = vld [vmem:[#allocation2 + $0xd0] sm:$0xff]
    %v93 = vld [vmem:[#allocation2 + $0xd8] sm:$0xff]
    %v94 = vld [vmem:[#allocation2 + $0xe0] sm:$0xff]
    %v95 = vld [vmem:[#allocation2 + $0xe8] sm:$0xff]
    %v96 = vld [vmem:[#allocation2 + $0xf0] sm:$0xff]
    %v97 = vld [vmem:[#allocation2 + $0xf8] sm:$0xff]
    %v98 = vld [vmem:[#allocation2 + $0x100] sm:$0xff]
    %v99 = vld [vmem:[#allocation2 + $0x108] sm:$0xff]
    %v100 = vld [vmem:[#allocation2 + $0x110] sm:$0xff]
    %v101 = vld [vmem:[#allocation2 + $0x118] sm:$0xff]
    %v102 = vld [vmem:[#allocation2 + $0x120] sm:$0xff]
    %v103 = vld [vmem:[#allocation2 + $0x128] sm:$0xff]
    %v104 = vld [vmem:[#allocation2 + $0x130] sm:$0xff]
    %v105 = vld [vmem:[#allocation2 + $0x138] sm:$0xff]
    %v106 = vld [vmem:[#allocation2 + $0x140] sm:$0xff]
    %v107 = vld [vmem:[#allocation2 + $0x148] sm:$0xff]
    %v108 = vld [vmem:[#allocation2 + $0x150] sm:$0xff]
    %v109 = vld [vmem:[#allocation2 + $0x158] sm:$0xff]
    %v110 = vld [vmem:[#allocation2 + $0x160] sm:$0xff]
    %v111 = vld [vmem:[#allocation2 + $0x168] sm:$0xff]
    %v112 = vld [vmem:[#allocation2 + $0x170] sm:$0xff]
    %v113 = vld [vmem:[#allocation2 + $0x178] sm:$0xff]
    %v114 = vld [vmem:[#allocation2 + $0x180] sm:$0xff]
    %v115 = vld [vmem:[#allocation2 + $0x188] sm:$0xff]
    %v116 = vld [vmem:[#allocation2 + $0x190] sm:$0xff]
    %v117 = vld [vmem:[#allocation2 + $0x198] sm:$0xff]
    %v118 = vld [vmem:[#allocation2 + $0x1a0] sm:$0xff]
    %v119 = vld [vmem:[#allocation2 + $0x1a8] sm:$0xff]
    %v120 = vld [vmem:[#allocation2 + $0x1b0] sm:$0xff]
    %v121 = vld [vmem:[#allocation2 + $0x1b8] sm:$0xff]
    %v122 = vld [vmem:[#allocation2 + $0x1c0] sm:$0xff]
    %v123 = vld [vmem:[#allocation2 + $0x1c8] sm:$0xff]
    %v124 = vld [vmem:[#allocation2 + $0x1d0] sm:$0xff]
    %v125 = vld [vmem:[#allocation2 + $0x1d8] sm:$0xff]
    %v126 = vld [vmem:[#allocation2 + $0x1e0] sm:$0xff]
    %v127 = vld [vmem:[#allocation2 + $0x1e8] sm:$0xff]
    %v128 = vld [vmem:[#allocation2 + $0x1f0] sm:$0xff]
    %v129 = vld [vmem:[#allocation2 + $0x1f8] sm:$0xff]
    %v130 = vld [vmem:[#allocation2 + $0x200] sm:$0xff]
    %v131 = vld [vmem:[#allocation2 + $0x208] sm:$0xff]
    %v132 = vld [vmem:[#allocation2 + $0x210] sm:$0xff]
    %v133 = vld [vmem:[#allocation2 + $0x218] sm:$0xff]
    %v134 = vld [vmem:[#allocation2 + $0x220] sm:$0xff]
    %v135 = vld [vmem:[#allocation2 + $0x228] sm:$0xff]
    %v136 = vld [vmem:[#allocation2 + $0x230] sm:$0xff]
    %v137 = vld [vmem:[#allocation2 + $0x238] sm:$0xff]
    %v138 = vld [vmem:[#allocation2 + $0x240] sm:$0xff]
    %v139 = vld [vmem:[#allocation2 + $0x248] sm:$0xff]
    %v140 = vld [vmem:[#allocation2 + $0x250] sm:$0xff]
    %v141 = vld [vmem:[#allocation2 + $0x258] sm:$0xff]
    %v142 = vld [vmem:[#allocation2 + $0x260] sm:$0xff]
    %v143 = vld [vmem:[#allocation2 + $0x268] sm:$0xff]
    %v144 = vld [vmem:[#allocation2 + $0x270] sm:$0xff]
    %v145 = vld [vmem:[#allocation2 + $0x278] sm:$0xff]
    %v146 = vld [vmem:[#allocation2 + $0x280] sm:$0xff]
    %v147 = vld [vmem:[#allocation2 + $0x288] sm:$0xff]
    %v148 = vld [vmem:[#allocation2 + $0x290] sm:$0xff]
    %v149 = vld [vmem:[#allocation2 + $0x298] sm:$0xff]
    %v150 = vld [vmem:[#allocation2 + $0x2a0] sm:$0xff]
    %v151 = vld [vmem:[#allocation2 + $0x2a8] sm:$0xff]
    %v152 = vld [vmem:[#allocation2 + $0x2b0] sm:$0xff]
    %v153 = vld [vmem:[#allocation2 + $0x2b8] sm:$0xff]
    %v154 = vld [vmem:[#allocation2 + $0x2c0] sm:$0xff]
    %v155 = vld [vmem:[#allocation2 + $0x2c8] sm:$0xff]
    %v156 = vld [vmem:[#allocation2 + $0x2d0] sm:$0xff]
    %v157 = vld [vmem:[#allocation2 + $0x2d8] sm:$0xff]
    %v158 = vld [vmem:[#allocation2 + $0x2e0] sm:$0xff]
    %v159 = vld [vmem:[#allocation2 + $0x2e8] sm:$0xff]
    %v160 = vld [vmem:[#allocation2 + $0x2f0] sm:$0xff]
    %v161 = vld [vmem:[#allocation2 + $0x2f8] sm:$0xff]
    %v162 = vld [vmem:[#allocation2 + $0x300] sm:$0xff]
    %v163 = vld [vmem:[#allocation2 + $0x308] sm:$0xff]
    %v164 = vld [vmem:[#allocation2 + $0x310] sm:$0xff]
    %v165 = vld [vmem:[#allocation2 + $0x318] sm:$0xff]
    %v166 = vld [vmem:[#allocation2 + $0x320] sm:$0xff]
    %v167 = vld [vmem:[#allocation2 + $0x328] sm:$0xff]
    %v168 = vld [vmem:[#allocation2 + $0x330] sm:$0xff]
    %v169 = vld [vmem:[#allocation2 + $0x338] sm:$0xff]
    %v170 = vld [vmem:[#allocation2 + $0x340] sm:$0xff]
    %v171 = vld [vmem:[#allocation2 + $0x348] sm:$0xff]
    %v172 = vld [vmem:[#allocation2 + $0x350] sm:$0xff]
    %v173 = vld [vmem:[#allocation2 + $0x358] sm:$0xff]
    %v174 = vld [vmem:[#allocation2 + $0x360] sm:$0xff]
    %v175 = vld [vmem:[#allocation2 + $0x368] sm:$0xff]
    %v176 = vld [vmem:[#allocation2 + $0x370] sm:$0xff]
    %v177 = vld [vmem:[#allocation2 + $0x378] sm:$0xff]
    %v178 = vld [vmem:[#allocation2 + $0x380] sm:$0xff]
    %v179 = vld [vmem:[#allocation2 + $0x388] sm:$0xff]
    %v180 = vld [vmem:[#allocation2 + $0x390] sm:$0xff]
    %v181 = vld [vmem:[#allocation2 + $0x398] sm:$0xff]
    %v182 = vld [vmem:[#allocation2 + $0x3a0] sm:$0xff]
    %v183 = vld [vmem:[#allocation2 + $0x3a8] sm:$0xff]
    %v184 = vld [vmem:[#allocation2 + $0x3b0] sm:$0xff]
    %v185 = vld [vmem:[#allocation2 + $0x3b8] sm:$0xff]
    %v186 = vld [vmem:[#allocation2 + $0x3c0] sm:$0xff]
    %v187 = vld [vmem:[#allocation2 + $0x3c8] sm:$0xff]
    %v188 = vld [vmem:[#allocation2 + $0x3d0] sm:$0xff]
    %v189 = vld [vmem:[#allocation2 + $0x3d8] sm:$0xff]
    %v190 = vld [vmem:[#allocation2 + $0x3e0] sm:$0xff]
    %v191 = vld [vmem:[#allocation2 + $0x3e8] sm:$0xff]
    %v192 = vld [vmem:[#allocation2 + $0x3f0] sm:$0xff]
    %v193 = vld [vmem:[#allocation2 + $0x3f8] sm:$0xff]
    %v194 = vld [vmem:[#allocation2 + $0x400] sm:$0xff]
    %v195 = vld [vmem:[#allocation2 + $0x408] sm:$0xff]
    %v196 = vld [vmem:[#allocation2 + $0x410] sm:$0xff]
    %v197 = vld [vmem:[#allocation2 + $0x418] sm:$0xff]
    %v198 = vld [vmem:[#allocation2 + $0x420] sm:$0xff]
    %v199 = vld [vmem:[#allocation2 + $0x428] sm:$0xff]
    %v200 = vld [vmem:[#allocation2 + $0x430] sm:$0xff]
    %v201 = vld [vmem:[#allocation2 + $0x438] sm:$0xff]
    %v202 = vld [vmem:[#allocation2 + $0x440] sm:$0xff]
    %v203 = vld [vmem:[#allocation2 + $0x448] sm:$0xff]
    %v204 = vld [vmem:[#allocation2 + $0x450] sm:$0xff]
    %v205 = vld [vmem:[#allocation2 + $0x458] sm:$0xff]
    %v206 = vld [vmem:[#allocation2 + $0x460] sm:$0xff]
    %v207 = vld [vmem:[#allocation2 + $0x468] sm:$0xff]
    %v208 = vld [vmem:[#allocation2 + $0x470] sm:$0xff]
    %v209 = vld [vmem:[#allocation2 + $0x478] sm:$0xff]
    %v210 = vld [vmem:[#allocation2 + $0x480] sm:$0xff]
    %v211 = vld [vmem:[#allocation2 + $0x488] sm:$0xff]
    %v212 = vld [vmem:[#allocation2 + $0x490] sm:$0xff]
    %v213 = vld [vmem:[#allocation2 + $0x498] sm:$0xff]
    %v214 = vld [vmem:[#allocation2 + $0x4a0] sm:$0xff]
    %v215 = vld [vmem:[#allocation2 + $0x4a8] sm:$0xff]
    %v216 = vld [vmem:[#allocation2 + $0x4b0] sm:$0xff]
    %v217 = vld [vmem:[#allocation2 + $0x4b8] sm:$0xff]
    %v218 = vld [vmem:[#allocation2 + $0x4c0] sm:$0xff]
    %v219 = vld [vmem:[#allocation2 + $0x4c8] sm:$0xff]
    %v220 = vld [vmem:[#allocation2 + $0x4d0] sm:$0xff]
    %v221 = vld [vmem:[#allocation2 + $0x4d8] sm:$0xff]
    %v222 = vld [vmem:[#allocation2 + $0x4e0] sm:$0xff]
    %v223 = vld [vmem:[#allocation2 + $0x4e8] sm:$0xff]
    %v224 = vld [vmem:[#allocation2 + $0x4f0] sm:$0xff]
    %v225 = vld [vmem:[#allocation2 + $0x4f8] sm:$0xff]
    %v226 = vld [vmem:[#allocation2 + $0x500] sm:$0xff]
    %v227 = vld [vmem:[#allocation2 + $0x508] sm:$0xff]
    %v228 = vld [vmem:[#allocation2 + $0x510] sm:$0xff]
    %v229 = vld [vmem:[#allocation2 + $0x518] sm:$0xff]
    %v230 = vld [vmem:[#allocation2 + $0x520] sm:$0xff]
    %v231 = vld [vmem:[#allocation2 + $0x528] sm:$0xff]
    %v232 = vld [vmem:[#allocation2 + $0x530] sm:$0xff]
    %v233 = vld [vmem:[#allocation2 + $0x538] sm:$0xff]
    %v234 = vld [vmem:[#allocation2 + $0x540] sm:$0xff]
    %v235 = vld [vmem:[#allocation2 + $0x548] sm:$0xff]
    %v236 = vld [vmem:[#allocation2 + $0x550] sm:$0xff]
    %v237 = vld [vmem:[#allocation2 + $0x558] sm:$0xff]
    %v238 = vld [vmem:[#allocation2 + $0x560] sm:$0xff]
    %v239 = vld [vmem:[#allocation2 + $0x568] sm:$0xff]
    %v240 = vld [vmem:[#allocation2 + $0x570] sm:$0xff]
    %v241 = vld [vmem:[#allocation2 + $0x578] sm:$0xff]
    %v242 = vld [vmem:[#allocation2 + $0x580] sm:$0xff]
    %v243 = vld [vmem:[#allocation2 + $0x588] sm:$0xff]
    %v244 = vld [vmem:[#allocation2 + $0x590] sm:$0xff]
    %v245 = vld [vmem:[#allocation2 + $0x598] sm:$0xff]
    %v246 = vld [vmem:[#allocation2 + $0x5a0] sm:$0xff]
    %v247 = vld [vmem:[#allocation2 + $0x5a8] sm:$0xff]
    %v248 = vld [vmem:[#allocation2 + $0x5b0] sm:$0xff]
    %v249 = vld [vmem:[#allocation2 + $0x5b8] sm:$0xff]
    %v250 = vld [vmem:[#allocation2 + $0x5c0] sm:$0xff]
    %v251 = vld [vmem:[#allocation2 + $0x5c8] sm:$0xff]
    %v252 = vld [vmem:[#allocation2 + $0x5d0] sm:$0xff]
    %v253 = vld [vmem:[#allocation2 + $0x5d8] sm:$0xff]
    %v254 = vld [vmem:[#allocation2 + $0x5e0] sm:$0xff]
    %v255 = vld [vmem:[#allocation2 + $0x5e8] sm:$0xff]
    %v256 = vld [vmem:[#allocation2 + $0x5f0] sm:$0xff]
    %v257 = vld [vmem:[#allocation2 + $0x5f8] sm:$0xff]
    %v258 = vld [vmem:[#allocation2 + $0x600] sm:$0xff]
    %v259 = vld [vmem:[#allocation2 + $0x608] sm:$0xff]
    %v260 = vld [vmem:[#allocation2 + $0x610] sm:$0xff]
    %v261 = vld [vmem:[#allocation2 + $0x618] sm:$0xff]
    %v262 = vld [vmem:[#allocation2 + $0x620] sm:$0xff]
    %v263 = vld [vmem:[#allocation2 + $0x628] sm:$0xff]
    %v264 = vld [vmem:[#allocation2 + $0x630] sm:$0xff]
    %v265 = vld [vmem:[#allocation2 + $0x638] sm:$0xff]
    %v266 = vld [vmem:[#allocation2 + $0x640] sm:$0xff]
    %v267 = vld [vmem:[#allocation2 + $0x648] sm:$0xff]
    %v268 = vld [vmem:[#allocation2 + $0x650] sm:$0xff]
    %v269 = vld [vmem:[#allocation2 + $0x658] sm:$0xff]
    %v270 = vld [vmem:[#allocation2 + $0x660] sm:$0xff]
    %v271 = vld [vmem:[#allocation2 + $0x668] sm:$0xff]
    %v272 = vld [vmem:[#allocation2 + $0x670] sm:$0xff]
    %v273 = vld [vmem:[#allocation2 + $0x678] sm:$0xff]
    %v274 = vld [vmem:[#allocation2 + $0x680] sm:$0xff]
    %v275 = vld [vmem:[#allocation2 + $0x688] sm:$0xff]
    %v276 = vld [vmem:[#allocation2 + $0x690] sm:$0xff]
    %v277 = vld [vmem:[#allocation2 + $0x698] sm:$0xff]
    %v278 = vld [vmem:[#allocation2 + $0x6a0] sm:$0xff]
    %v279 = vld [vmem:[#allocation2 + $0x6a8] sm:$0xff]
    %v280 = vld [vmem:[#allocation2 + $0x6b0] sm:$0xff]
    %v281 = vld [vmem:[#allocation2 + $0x6b8] sm:$0xff]
    %v282 = vld [vmem:[#allocation2 + $0x6c0] sm:$0xff]
    %v283 = vld [vmem:[#allocation2 + $0x6c8] sm:$0xff]
    %v284 = vld [vmem:[#allocation2 + $0x6d0] sm:$0xff]
    %v285 = vld [vmem:[#allocation2 + $0x6d8] sm:$0xff]
    %v286 = vld [vmem:[#allocation2 + $0x6e0] sm:$0xff]
    %v287 = vld [vmem:[#allocation2 + $0x6e8] sm:$0xff]
    %v288 = vld [vmem:[#allocation2 + $0x6f0] sm:$0xff]
    %v289 = vld [vmem:[#allocation2 + $0x6f8] sm:$0xff]
    %v290 = vld [vmem:[%s2] sm:$0xf]
    %v292 = vperm.slane %v290, 0
    %v293 = vperm.slane %v290, 1
    %v294 = vperm.slane %v290, 2
    %v295 = vperm.slane %v290, 3
    %v308 = vunpack.c.l.b16 %v58
    %v309 = vunpack.c.h.b16 %v58
    %v310 = vunpack.c.l.b16 %v59
    %v311 = vunpack.c.h.b16 %v59
    %v312 = vunpack.c.l.b16 %v60
    %v313 = vunpack.c.h.b16 %v60
    %v314 = vunpack.c.l.b16 %v61
    %v315 = vunpack.c.l.b16 %v62
    %v316 = vunpack.c.h.b16 %v62
    %v317 = vunpack.c.l.b16 %v63
    %v318 = vunpack.c.h.b16 %v63
    %v319 = vunpack.c.l.b16 %v64
    %v320 = vunpack.c.h.b16 %v64
    %v321 = vunpack.c.l.b16 %v65
    %v322 = vpack.c.b16 %v315, %v308
    %v323 = vpack.c.b16 %v316, %v309
    %v324 = vpack.c.b16 %v317, %v310
    %v325 = vpack.c.b16 %v318, %v311
    %v326 = vpack.c.b16 %v319, %v312
    %v327 = vpack.c.b16 %v320, %v313
    %v328 = vpack.c.b16 %v321, %v314
    %v560 = vunpack.c.l.b16 %v66
    %v561 = vunpack.c.h.b16 %v66
    %v562 = vunpack.c.l.b16 %v67
    %v563 = vunpack.c.h.b16 %v67
    %v564 = vunpack.c.l.b16 %v68
    %v565 = vunpack.c.h.b16 %v68
    %v566 = vunpack.c.l.b16 %v69
    %v567 = vunpack.c.h.b16 %v69
    %v568 = vunpack.c.l.b16 %v70
    %v569 = vunpack.c.h.b16 %v70
    %v570 = vunpack.c.l.b16 %v71
    %v571 = vunpack.c.h.b16 %v71
    %v572 = vunpack.c.l.b16 %v72
    %v573 = vunpack.c.h.b16 %v72
    %v574 = vunpack.c.l.b16 %v73
    %v575 = vunpack.c.h.b16 %v73
    %v576 = vunpack.c.l.b16 %v74
    %v577 = vunpack.c.h.b16 %v74
    %v578 = vunpack.c.l.b16 %v75
    %v579 = vunpack.c.h.b16 %v75
    %v580 = vunpack.c.l.b16 %v76
    %v581 = vunpack.c.h.b16 %v76
    %v582 = vunpack.c.l.b16 %v77
    %v583 = vunpack.c.h.b16 %v77
    %v584 = vunpack.c.l.b16 %v78
    %v585 = vunpack.c.h.b16 %v78
    %v586 = vunpack.c.l.b16 %v79
    %v587 = vunpack.c.h.b16 %v79
    %v588 = vunpack.c.l.b16 %v80
    %v589 = vunpack.c.h.b16 %v80
    %v590 = vunpack.c.l.b16 %v81
    %v591 = vunpack.c.h.b16 %v81
    %v592 = vunpack.c.l.b16 %v82
    %v593 = vunpack.c.h.b16 %v82
    %v594 = vunpack.c.l.b16 %v83
    %v595 = vunpack.c.h.b16 %v83
    %v596 = vunpack.c.l.b16 %v84
    %v597 = vunpack.c.h.b16 %v84
    %v598 = vunpack.c.l.b16 %v85
    %v599 = vunpack.c.h.b16 %v85
    %v600 = vunpack.c.l.b16 %v86
    %v601 = vunpack.c.h.b16 %v86
    %v602 = vunpack.c.l.b16 %v87
    %v603 = vunpack.c.h.b16 %v87
    %v604 = vunpack.c.l.b16 %v88
    %v605 = vunpack.c.h.b16 %v88
    %v606 = vunpack.c.l.b16 %v89
    %v607 = vunpack.c.h.b16 %v89
    %v608 = vunpack.c.l.b16 %v90
    %v609 = vunpack.c.h.b16 %v90
    %v610 = vunpack.c.l.b16 %v91
    %v611 = vunpack.c.h.b16 %v91
    %v612 = vunpack.c.l.b16 %v92
    %v613 = vunpack.c.h.b16 %v92
    %v614 = vunpack.c.l.b16 %v93
    %v615 = vunpack.c.h.b16 %v93
    %v616 = vunpack.c.l.b16 %v94
    %v617 = vunpack.c.h.b16 %v94
    %v618 = vunpack.c.l.b16 %v95
    %v619 = vunpack.c.h.b16 %v95
    %v620 = vunpack.c.l.b16 %v96
    %v621 = vunpack.c.h.b16 %v96
    %v622 = vunpack.c.l.b16 %v97
    %v623 = vunpack.c.h.b16 %v97
    %v624 = vunpack.c.l.b16 %v98
    %v625 = vunpack.c.h.b16 %v98
    %v626 = vunpack.c.l.b16 %v99
    %v627 = vunpack.c.h.b16 %v99
    %v628 = vunpack.c.l.b16 %v100
    %v629 = vunpack.c.h.b16 %v100
    %v630 = vunpack.c.l.b16 %v101
    %v631 = vunpack.c.h.b16 %v101
    %v632 = vunpack.c.l.b16 %v102
    %v633 = vunpack.c.h.b16 %v102
    %v634 = vunpack.c.l.b16 %v103
    %v635 = vunpack.c.h.b16 %v103
    %v636 = vunpack.c.l.b16 %v104
    %v637 = vunpack.c.h.b16 %v104
    %v638 = vunpack.c.l.b16 %v105
    %v639 = vunpack.c.h.b16 %v105
    %v640 = vunpack.c.l.b16 %v106
    %v641 = vunpack.c.h.b16 %v106
    %v642 = vunpack.c.l.b16 %v107
    %v643 = vunpack.c.h.b16 %v107
    %v644 = vunpack.c.l.b16 %v108
    %v645 = vunpack.c.h.b16 %v108
    %v646 = vunpack.c.l.b16 %v109
    %v647 = vunpack.c.h.b16 %v109
    %v648 = vunpack.c.l.b16 %v110
    %v649 = vunpack.c.h.b16 %v110
    %v650 = vunpack.c.l.b16 %v111
    %v651 = vunpack.c.h.b16 %v111
    %v652 = vunpack.c.l.b16 %v112
    %v653 = vunpack.c.h.b16 %v112
    %v654 = vunpack.c.l.b16 %v113
    %v655 = vunpack.c.h.b16 %v113
    %v656 = vunpack.c.l.b16 %v114
    %v657 = vunpack.c.h.b16 %v114
    %v658 = vunpack.c.l.b16 %v115
    %v659 = vunpack.c.h.b16 %v115
    %v660 = vunpack.c.l.b16 %v116
    %v661 = vunpack.c.h.b16 %v116
    %v662 = vunpack.c.l.b16 %v117
    %v663 = vunpack.c.h.b16 %v117
    %v664 = vunpack.c.l.b16 %v118
    %v665 = vunpack.c.h.b16 %v118
    %v666 = vunpack.c.l.b16 %v119
    %v667 = vunpack.c.h.b16 %v119
    %v668 = vunpack.c.l.b16 %v120
    %v669 = vunpack.c.h.b16 %v120
    %v670 = vunpack.c.l.b16 %v121
    %v671 = vunpack.c.h.b16 %v121
    %v672 = vunpack.c.l.b16 %v122
    %v673 = vunpack.c.h.b16 %v122
    %v674 = vunpack.c.l.b16 %v123
    %v675 = vunpack.c.h.b16 %v123
    %v676 = vunpack.c.l.b16 %v124
    %v677 = vunpack.c.h.b16 %v124
    %v678 = vunpack.c.l.b16 %v125
    %v679 = vunpack.c.h.b16 %v125
    %v680 = vunpack.c.l.b16 %v126
    %v681 = vunpack.c.h.b16 %v126
    %v682 = vunpack.c.l.b16 %v127
    %v683 = vunpack.c.h.b16 %v127
    %v684 = vunpack.c.l.b16 %v128
    %v685 = vunpack.c.h.b16 %v128
    %v686 = vunpack.c.l.b16 %v129
    %v687 = vunpack.c.h.b16 %v129
    %v688 = vunpack.c.l.b16 %v130
    %v689 = vunpack.c.h.b16 %v130
    %v690 = vunpack.c.l.b16 %v131
    %v691 = vunpack.c.h.b16 %v131
    %v692 = vunpack.c.l.b16 %v132
    %v693 = vunpack.c.h.b16 %v132
    %v694 = vunpack.c.l.b16 %v133
    %v695 = vunpack.c.h.b16 %v133
    %v696 = vunpack.c.l.b16 %v134
    %v697 = vunpack.c.h.b16 %v134
    %v698 = vunpack.c.l.b16 %v135
    %v699 = vunpack.c.h.b16 %v135
    %v700 = vunpack.c.l.b16 %v136
    %v701 = vunpack.c.h.b16 %v136
    %v702 = vunpack.c.l.b16 %v137
    %v703 = vunpack.c.h.b16 %v137
    %v704 = vunpack.c.l.b16 %v138
    %v705 = vunpack.c.h.b16 %v138
    %v706 = vunpack.c.l.b16 %v139
    %v707 = vunpack.c.h.b16 %v139
    %v708 = vunpack.c.l.b16 %v140
    %v709 = vunpack.c.h.b16 %v140
    %v710 = vunpack.c.l.b16 %v141
    %v711 = vunpack.c.h.b16 %v141
    %v712 = vunpack.c.l.b16 %v142
    %v713 = vunpack.c.h.b16 %v142
    %v714 = vunpack.c.l.b16 %v143
    %v715 = vunpack.c.h.b16 %v143
    %v716 = vunpack.c.l.b16 %v144
    %v717 = vunpack.c.h.b16 %v144
    %v718 = vunpack.c.l.b16 %v145
    %v719 = vunpack.c.h.b16 %v145
    %v720 = vunpack.c.l.b16 %v146
    %v721 = vunpack.c.h.b16 %v146
    %v722 = vunpack.c.l.b16 %v147
    %v723 = vunpack.c.h.b16 %v147
    %v724 = vunpack.c.l.b16 %v148
    %v725 = vunpack.c.h.b16 %v148
    %v726 = vunpack.c.l.b16 %v149
    %v727 = vunpack.c.h.b16 %v149
    %v728 = vunpack.c.l.b16 %v150
    %v729 = vunpack.c.h.b16 %v150
    %v730 = vunpack.c.l.b16 %v151
    %v731 = vunpack.c.h.b16 %v151
    %v732 = vunpack.c.l.b16 %v152
    %v733 = vunpack.c.h.b16 %v152
    %v734 = vunpack.c.l.b16 %v153
    %v735 = vunpack.c.h.b16 %v153
    %v736 = vunpack.c.l.b16 %v154
    %v737 = vunpack.c.h.b16 %v154
    %v738 = vunpack.c.l.b16 %v155
    %v739 = vunpack.c.h.b16 %v155
    %v740 = vunpack.c.l.b16 %v156
    %v741 = vunpack.c.h.b16 %v156
    %v742 = vunpack.c.l.b16 %v157
    %v743 = vunpack.c.h.b16 %v157
    %v744 = vunpack.c.l.b16 %v158
    %v745 = vunpack.c.h.b16 %v158
    %v746 = vunpack.c.l.b16 %v159
    %v747 = vunpack.c.h.b16 %v159
    %v748 = vunpack.c.l.b16 %v160
    %v749 = vunpack.c.h.b16 %v160
    %v750 = vunpack.c.l.b16 %v161
    %v751 = vunpack.c.h.b16 %v161
    %v752 = vunpack.c.l.b16 %v162
    %v753 = vunpack.c.h.b16 %v162
    %v754 = vunpack.c.l.b16 %v163
    %v755 = vunpack.c.h.b16 %v163
    %v756 = vunpack.c.l.b16 %v164
    %v757 = vunpack.c.h.b16 %v164
    %v758 = vunpack.c.l.b16 %v165
    %v759 = vunpack.c.h.b16 %v165
    %v760 = vunpack.c.l.b16 %v166
    %v761 = vunpack.c.h.b16 %v166
    %v762 = vunpack.c.l.b16 %v167
    %v763 = vunpack.c.h.b16 %v167
    %v764 = vunpack.c.l.b16 %v168
    %v765 = vunpack.c.h.b16 %v168
    %v766 = vunpack.c.l.b16 %v169
    %v767 = vunpack.c.h.b16 %v169
    %v768 = vunpack.c.l.b16 %v170
    %v769 = vunpack.c.h.b16 %v170
    %v770 = vunpack.c.l.b16 %v171
    %v771 = vunpack.c.h.b16 %v171
    %v772 = vunpack.c.l.b16 %v172
    %v773 = vunpack.c.h.b16 %v172
    %v774 = vunpack.c.l.b16 %v173
    %v775 = vunpack.c.h.b16 %v173
    %v776 = vunpack.c.l.b16 %v174
    %v777 = vunpack.c.h.b16 %v174
    %v778 = vunpack.c.l.b16 %v175
    %v779 = vunpack.c.h.b16 %v175
    %v780 = vunpack.c.l.b16 %v176
    %v781 = vunpack.c.h.b16 %v176
    %v782 = vunpack.c.l.b16 %v177
    %v783 = vunpack.c.h.b16 %v177
    %v784 = vunpack.c.l.b16 %v178
    %v785 = vunpack.c.h.b16 %v178
    %v786 = vunpack.c.l.b16 %v179
    %v787 = vunpack.c.h.b16 %v179
    %v788 = vunpack.c.l.b16 %v180
    %v789 = vunpack.c.h.b16 %v180
    %v790 = vunpack.c.l.b16 %v181
    %v791 = vunpack.c.h.b16 %v181
    %v792 = vunpack.c.l.b16 %v182
    %v793 = vunpack.c.h.b16 %v182
    %v794 = vunpack.c.l.b16 %v183
    %v795 = vunpack.c.h.b16 %v183
    %v796 = vunpack.c.l.b16 %v184
    %v797 = vunpack.c.h.b16 %v184
    %v798 = vunpack.c.l.b16 %v185
    %v799 = vunpack.c.h.b16 %v185
    %v800 = vunpack.c.l.b16 %v186
    %v801 = vunpack.c.h.b16 %v186
    %v802 = vunpack.c.l.b16 %v187
    %v803 = vunpack.c.h.b16 %v187
    %v804 = vunpack.c.l.b16 %v188
    %v805 = vunpack.c.h.b16 %v188
    %v806 = vunpack.c.l.b16 %v189
    %v807 = vunpack.c.h.b16 %v189
    %v808 = vunpack.c.l.b16 %v190
    %v809 = vunpack.c.h.b16 %v190
    %v810 = vunpack.c.l.b16 %v191
    %v811 = vunpack.c.h.b16 %v191
    %v812 = vunpack.c.l.b16 %v192
    %v813 = vunpack.c.h.b16 %v192
    %v814 = vunpack.c.l.b16 %v193
    %v815 = vunpack.c.h.b16 %v193
    %v816 = vunpack.c.l.b16 %v194
    %v817 = vunpack.c.h.b16 %v194
    %v818 = vunpack.c.l.b16 %v195
    %v819 = vunpack.c.h.b16 %v195
    %v820 = vunpack.c.l.b16 %v196
    %v821 = vunpack.c.h.b16 %v196
    %v822 = vunpack.c.l.b16 %v197
    %v823 = vunpack.c.h.b16 %v197
    %v824 = vunpack.c.l.b16 %v198
    %v825 = vunpack.c.h.b16 %v198
    %v826 = vunpack.c.l.b16 %v199
    %v827 = vunpack.c.h.b16 %v199
    %v828 = vunpack.c.l.b16 %v200
    %v829 = vunpack.c.h.b16 %v200
    %v830 = vunpack.c.l.b16 %v201
    %v831 = vunpack.c.h.b16 %v201
    %v832 = vunpack.c.l.b16 %v202
    %v833 = vunpack.c.h.b16 %v202
    %v834 = vunpack.c.l.b16 %v203
    %v835 = vunpack.c.h.b16 %v203
    %v836 = vunpack.c.l.b16 %v204
    %v837 = vunpack.c.h.b16 %v204
    %v838 = vunpack.c.l.b16 %v205
    %v839 = vunpack.c.h.b16 %v205
    %v840 = vunpack.c.l.b16 %v206
    %v841 = vunpack.c.h.b16 %v206
    %v842 = vunpack.c.l.b16 %v207
    %v843 = vunpack.c.h.b16 %v207
    %v844 = vunpack.c.l.b16 %v208
    %v845 = vunpack.c.h.b16 %v208
    %v846 = vunpack.c.l.b16 %v209
    %v847 = vunpack.c.h.b16 %v209
    %v848 = vunpack.c.l.b16 %v210
    %v849 = vunpack.c.h.b16 %v210
    %v850 = vunpack.c.l.b16 %v211
    %v851 = vunpack.c.h.b16 %v211
    %v852 = vunpack.c.l.b16 %v212
    %v853 = vunpack.c.h.b16 %v212
    %v854 = vunpack.c.l.b16 %v213
    %v855 = vunpack.c.h.b16 %v213
    %v856 = vunpack.c.l.b16 %v214
    %v857 = vunpack.c.h.b16 %v214
    %v858 = vunpack.c.l.b16 %v215
    %v859 = vunpack.c.h.b16 %v215
    %v860 = vunpack.c.l.b16 %v216
    %v861 = vunpack.c.h.b16 %v216
    %v862 = vunpack.c.l.b16 %v217
    %v863 = vunpack.c.h.b16 %v217
    %v864 = vunpack.c.l.b16 %v218
    %v865 = vunpack.c.h.b16 %v218
    %v866 = vunpack.c.l.b16 %v219
    %v867 = vunpack.c.h.b16 %v219
    %v868 = vunpack.c.l.b16 %v220
    %v869 = vunpack.c.h.b16 %v220
    %v870 = vunpack.c.l.b16 %v221
    %v871 = vunpack.c.h.b16 %v221
    %v872 = vunpack.c.l.b16 %v222
    %v873 = vunpack.c.h.b16 %v222
    %v874 = vunpack.c.l.b16 %v223
    %v875 = vunpack.c.h.b16 %v223
    %v876 = vunpack.c.l.b16 %v224
    %v877 = vunpack.c.h.b16 %v224
    %v878 = vunpack.c.l.b16 %v225
    %v879 = vunpack.c.h.b16 %v225
    %v880 = vunpack.c.l.b16 %v226
    %v881 = vunpack.c.h.b16 %v226
    %v882 = vunpack.c.l.b16 %v227
    %v883 = vunpack.c.h.b16 %v227
    %v884 = vunpack.c.l.b16 %v228
    %v885 = vunpack.c.h.b16 %v228
    %v886 = vunpack.c.l.b16 %v229
    %v887 = vunpack.c.h.b16 %v229
    %v888 = vunpack.c.l.b16 %v230
    %v889 = vunpack.c.h.b16 %v230
    %v890 = vunpack.c.l.b16 %v231
    %v891 = vunpack.c.h.b16 %v231
    %v892 = vunpack.c.l.b16 %v232
    %v893 = vunpack.c.h.b16 %v232
    %v894 = vunpack.c.l.b16 %v233
    %v895 = vunpack.c.h.b16 %v233
    %v896 = vunpack.c.l.b16 %v234
    %v897 = vunpack.c.h.b16 %v234
    %v898 = vunpack.c.l.b16 %v235
    %v899 = vunpack.c.h.b16 %v235
    %v900 = vunpack.c.l.b16 %v236
    %v901 = vunpack.c.h.b16 %v236
    %v902 = vunpack.c.l.b16 %v237
    %v903 = vunpack.c.h.b16 %v237
    %v904 = vunpack.c.l.b16 %v238
    %v905 = vunpack.c.h.b16 %v238
    %v906 = vunpack.c.l.b16 %v239
    %v907 = vunpack.c.h.b16 %v239
    %v908 = vunpack.c.l.b16 %v240
    %v909 = vunpack.c.h.b16 %v240
    %v910 = vunpack.c.l.b16 %v241
    %v911 = vunpack.c.h.b16 %v241
    %v912 = vunpack.c.l.b16 %v242
    %v913 = vunpack.c.h.b16 %v242
    %v914 = vunpack.c.l.b16 %v243
    %v915 = vunpack.c.h.b16 %v243
    %v916 = vunpack.c.l.b16 %v244
    %v917 = vunpack.c.h.b16 %v244
    %v918 = vunpack.c.l.b16 %v245
    %v919 = vunpack.c.h.b16 %v245
    %v920 = vunpack.c.l.b16 %v246
    %v921 = vunpack.c.h.b16 %v246
    %v922 = vunpack.c.l.b16 %v247
    %v923 = vunpack.c.h.b16 %v247
    %v924 = vunpack.c.l.b16 %v248
    %v925 = vunpack.c.h.b16 %v248
    %v926 = vunpack.c.l.b16 %v249
    %v927 = vunpack.c.h.b16 %v249
    %v928 = vunpack.c.l.b16 %v250
    %v929 = vunpack.c.h.b16 %v250
    %v930 = vunpack.c.l.b16 %v251
    %v931 = vunpack.c.h.b16 %v251
    %v932 = vunpack.c.l.b16 %v252
    %v933 = vunpack.c.h.b16 %v252
    %v934 = vunpack.c.l.b16 %v253
    %v935 = vunpack.c.h.b16 %v253
    %v936 = vunpack.c.l.b16 %v254
    %v937 = vunpack.c.h.b16 %v254
    %v938 = vunpack.c.l.b16 %v255
    %v939 = vunpack.c.h.b16 %v255
    %v940 = vunpack.c.l.b16 %v256
    %v941 = vunpack.c.h.b16 %v256
    %v942 = vunpack.c.l.b16 %v257
    %v943 = vunpack.c.h.b16 %v257
    %v944 = vunpack.c.l.b16 %v258
    %v945 = vunpack.c.h.b16 %v258
    %v946 = vunpack.c.l.b16 %v259
    %v947 = vunpack.c.h.b16 %v259
    %v948 = vunpack.c.l.b16 %v260
    %v949 = vunpack.c.h.b16 %v260
    %v950 = vunpack.c.l.b16 %v261
    %v951 = vunpack.c.h.b16 %v261
    %v952 = vunpack.c.l.b16 %v262
    %v953 = vunpack.c.h.b16 %v262
    %v954 = vunpack.c.l.b16 %v263
    %v955 = vunpack.c.h.b16 %v263
    %v956 = vunpack.c.l.b16 %v264
    %v957 = vunpack.c.h.b16 %v264
    %v958 = vunpack.c.l.b16 %v265
    %v959 = vunpack.c.h.b16 %v265
    %v960 = vunpack.c.l.b16 %v266
    %v961 = vunpack.c.h.b16 %v266
    %v962 = vunpack.c.l.b16 %v267
    %v963 = vunpack.c.h.b16 %v267
    %v964 = vunpack.c.l.b16 %v268
    %v965 = vunpack.c.h.b16 %v268
    %v966 = vunpack.c.l.b16 %v269
    %v967 = vunpack.c.h.b16 %v269
    %v968 = vunpack.c.l.b16 %v270
    %v969 = vunpack.c.h.b16 %v270
    %v970 = vunpack.c.l.b16 %v271
    %v971 = vunpack.c.h.b16 %v271
    %v972 = vunpack.c.l.b16 %v272
    %v973 = vunpack.c.h.b16 %v272
    %v974 = vunpack.c.l.b16 %v273
    %v975 = vunpack.c.h.b16 %v273
    %v976 = vunpack.c.l.b16 %v274
    %v977 = vunpack.c.h.b16 %v274
    %v978 = vunpack.c.l.b16 %v275
    %v979 = vunpack.c.h.b16 %v275
    %v980 = vunpack.c.l.b16 %v276
    %v981 = vunpack.c.h.b16 %v276
    %v982 = vunpack.c.l.b16 %v277
    %v983 = vunpack.c.h.b16 %v277
    %v984 = vunpack.c.l.b16 %v278
    %v985 = vunpack.c.h.b16 %v278
    %v986 = vunpack.c.l.b16 %v279
    %v987 = vunpack.c.h.b16 %v279
    %v988 = vunpack.c.l.b16 %v280
    %v989 = vunpack.c.h.b16 %v280
    %v990 = vunpack.c.l.b16 %v281
    %v991 = vunpack.c.h.b16 %v281
    %v992 = vunpack.c.l.b16 %v282
    %v993 = vunpack.c.h.b16 %v282
    %v994 = vunpack.c.l.b16 %v283
    %v995 = vunpack.c.h.b16 %v283
    %v996 = vunpack.c.l.b16 %v284
    %v997 = vunpack.c.h.b16 %v284
    %v998 = vunpack.c.l.b16 %v285
    %v999 = vunpack.c.h.b16 %v285
    %v1000 = vunpack.c.l.b16 %v286
    %v1001 = vunpack.c.h.b16 %v286
    %v1002 = vunpack.c.l.b16 %v287
    %v1003 = vunpack.c.h.b16 %v287
    %v1004 = vunpack.c.l.b16 %v288
    %v1005 = vunpack.c.h.b16 %v288
    %v1006 = vunpack.c.l.b16 %v289
    %v1007 = vunpack.c.h.b16 %v289
    %v1008 = vpack.c.b16 %v564, %v560
    %v1009 = vpack.c.b16 %v565, %v561
    %v1010 = vpack.c.b16 %v566, %v562
    %v1011 = vpack.c.b16 %v567, %v563
    %v1012 = vpack.c.b16 %v572, %v568
    %v1013 = vpack.c.b16 %v573, %v569
    %v1014 = vpack.c.b16 %v574, %v570
    %v1015 = vpack.c.b16 %v575, %v571
    %v1016 = vpack.c.b16 %v580, %v576
    %v1017 = vpack.c.b16 %v581, %v577
    %v1018 = vpack.c.b16 %v582, %v578
    %v1019 = vpack.c.b16 %v583, %v579
    %v1020 = vpack.c.b16 %v588, %v584
    %v1021 = vpack.c.b16 %v589, %v585
    %v1022 = vpack.c.b16 %v590, %v586
    %v1023 = vpack.c.b16 %v591, %v587
    %v1024 = vpack.c.b16 %v596, %v592
    %v1025 = vpack.c.b16 %v597, %v593
    %v1026 = vpack.c.b16 %v598, %v594
    %v1027 = vpack.c.b16 %v599, %v595
    %v1028 = vpack.c.b16 %v604, %v600
    %v1029 = vpack.c.b16 %v605, %v601
    %v1030 = vpack.c.b16 %v606, %v602
    %v1031 = vpack.c.b16 %v607, %v603
    %v1032 = vpack.c.b16 %v612, %v608
    %v1033 = vpack.c.b16 %v613, %v609
    %v1034 = vpack.c.b16 %v614, %v610
    %v1035 = vpack.c.b16 %v615, %v611
    %v1036 = vpack.c.b16 %v620, %v616
    %v1037 = vpack.c.b16 %v621, %v617
    %v1038 = vpack.c.b16 %v622, %v618
    %v1039 = vpack.c.b16 %v623, %v619
    %v1040 = vpack.c.b16 %v628, %v624
    %v1041 = vpack.c.b16 %v629, %v625
    %v1042 = vpack.c.b16 %v630, %v626
    %v1043 = vpack.c.b16 %v631, %v627
    %v1044 = vpack.c.b16 %v636, %v632
    %v1045 = vpack.c.b16 %v637, %v633
    %v1046 = vpack.c.b16 %v638, %v634
    %v1047 = vpack.c.b16 %v639, %v635
    %v1048 = vpack.c.b16 %v644, %v640
    %v1049 = vpack.c.b16 %v645, %v641
    %v1050 = vpack.c.b16 %v646, %v642
    %v1051 = vpack.c.b16 %v647, %v643
    %v1052 = vpack.c.b16 %v652, %v648
    %v1053 = vpack.c.b16 %v653, %v649
    %v1054 = vpack.c.b16 %v654, %v650
    %v1055 = vpack.c.b16 %v655, %v651
    %v1056 = vpack.c.b16 %v660, %v656
    %v1057 = vpack.c.b16 %v661, %v657
    %v1058 = vpack.c.b16 %v662, %v658
    %v1059 = vpack.c.b16 %v663, %v659
    %v1060 = vpack.c.b16 %v668, %v664
    %v1061 = vpack.c.b16 %v669, %v665
    %v1062 = vpack.c.b16 %v670, %v666
    %v1063 = vpack.c.b16 %v671, %v667
    %v1064 = vpack.c.b16 %v676, %v672
    %v1065 = vpack.c.b16 %v677, %v673
    %v1066 = vpack.c.b16 %v678, %v674
    %v1067 = vpack.c.b16 %v679, %v675
    %v1068 = vpack.c.b16 %v684, %v680
    %v1069 = vpack.c.b16 %v685, %v681
    %v1070 = vpack.c.b16 %v686, %v682
    %v1071 = vpack.c.b16 %v687, %v683
    %v1072 = vpack.c.b16 %v692, %v688
    %v1073 = vpack.c.b16 %v693, %v689
    %v1074 = vpack.c.b16 %v694, %v690
    %v1075 = vpack.c.b16 %v695, %v691
    %v1076 = vpack.c.b16 %v700, %v696
    %v1077 = vpack.c.b16 %v701, %v697
    %v1078 = vpack.c.b16 %v702, %v698
    %v1079 = vpack.c.b16 %v703, %v699
    %v1080 = vpack.c.b16 %v708, %v704
    %v1081 = vpack.c.b16 %v709, %v705
    %v1082 = vpack.c.b16 %v710, %v706
    %v1083 = vpack.c.b16 %v711, %v707
    %v1084 = vpack.c.b16 %v716, %v712
    %v1085 = vpack.c.b16 %v717, %v713
    %v1086 = vpack.c.b16 %v718, %v714
    %v1087 = vpack.c.b16 %v719, %v715
    %v1088 = vpack.c.b16 %v724, %v720
    %v1089 = vpack.c.b16 %v725, %v721
    %v1090 = vpack.c.b16 %v726, %v722
    %v1091 = vpack.c.b16 %v727, %v723
    %v1092 = vpack.c.b16 %v732, %v728
    %v1093 = vpack.c.b16 %v733, %v729
    %v1094 = vpack.c.b16 %v734, %v730
    %v1095 = vpack.c.b16 %v735, %v731
    %v1096 = vpack.c.b16 %v740, %v736
    %v1097 = vpack.c.b16 %v741, %v737
    %v1098 = vpack.c.b16 %v742, %v738
    %v1099 = vpack.c.b16 %v743, %v739
    %v1100 = vpack.c.b16 %v748, %v744
    %v1101 = vpack.c.b16 %v749, %v745
    %v1102 = vpack.c.b16 %v750, %v746
    %v1103 = vpack.c.b16 %v751, %v747
    %v1104 = vpack.c.b16 %v756, %v752
    %v1105 = vpack.c.b16 %v757, %v753
    %v1106 = vpack.c.b16 %v758, %v754
    %v1107 = vpack.c.b16 %v759, %v755
    %v1108 = vpack.c.b16 %v764, %v760
    %v1109 = vpack.c.b16 %v765, %v761
    %v1110 = vpack.c.b16 %v766, %v762
    %v1111 = vpack.c.b16 %v767, %v763
    %v1112 = vpack.c.b16 %v772, %v768
    %v1113 = vpack.c.b16 %v773, %v769
    %v1114 = vpack.c.b16 %v774, %v770
    %v1115 = vpack.c.b16 %v775, %v771
    %v1116 = vpack.c.b16 %v780, %v776
    %v1117 = vpack.c.b16 %v781, %v777
    %v1118 = vpack.c.b16 %v782, %v778
    %v1119 = vpack.c.b16 %v783, %v779
    %v1120 = vpack.c.b16 %v788, %v784
    %v1121 = vpack.c.b16 %v789, %v785
    %v1122 = vpack.c.b16 %v790, %v786
    %v1123 = vpack.c.b16 %v791, %v787
    %v1124 = vpack.c.b16 %v796, %v792
    %v1125 = vpack.c.b16 %v797, %v793
    %v1126 = vpack.c.b16 %v798, %v794
    %v1127 = vpack.c.b16 %v799, %v795
    %v1128 = vpack.c.b16 %v804, %v800
    %v1129 = vpack.c.b16 %v805, %v801
    %v1130 = vpack.c.b16 %v806, %v802
    %v1131 = vpack.c.b16 %v807, %v803
    %v1132 = vpack.c.b16 %v812, %v808
    %v1133 = vpack.c.b16 %v813, %v809
    %v1134 = vpack.c.b16 %v814, %v810
    %v1135 = vpack.c.b16 %v815, %v811
    %v1136 = vpack.c.b16 %v820, %v816
    %v1137 = vpack.c.b16 %v821, %v817
    %v1138 = vpack.c.b16 %v822, %v818
    %v1139 = vpack.c.b16 %v823, %v819
    %v1140 = vpack.c.b16 %v828, %v824
    %v1141 = vpack.c.b16 %v829, %v825
    %v1142 = vpack.c.b16 %v830, %v826
    %v1143 = vpack.c.b16 %v831, %v827
    %v1144 = vpack.c.b16 %v836, %v832
    %v1145 = vpack.c.b16 %v837, %v833
    %v1146 = vpack.c.b16 %v838, %v834
    %v1147 = vpack.c.b16 %v839, %v835
    %v1148 = vpack.c.b16 %v844, %v840
    %v1149 = vpack.c.b16 %v845, %v841
    %v1150 = vpack.c.b16 %v846, %v842
    %v1151 = vpack.c.b16 %v847, %v843
    %v1152 = vpack.c.b16 %v852, %v848
    %v1153 = vpack.c.b16 %v853, %v849
    %v1154 = vpack.c.b16 %v854, %v850
    %v1155 = vpack.c.b16 %v855, %v851
    %v1156 = vpack.c.b16 %v860, %v856
    %v1157 = vpack.c.b16 %v861, %v857
    %v1158 = vpack.c.b16 %v862, %v858
    %v1159 = vpack.c.b16 %v863, %v859
    %v1160 = vpack.c.b16 %v868, %v864
    %v1161 = vpack.c.b16 %v869, %v865
    %v1162 = vpack.c.b16 %v870, %v866
    %v1163 = vpack.c.b16 %v871, %v867
    %v1164 = vpack.c.b16 %v876, %v872
    %v1165 = vpack.c.b16 %v877, %v873
    %v1166 = vpack.c.b16 %v878, %v874
    %v1167 = vpack.c.b16 %v879, %v875
    %v1168 = vpack.c.b16 %v884, %v880
    %v1169 = vpack.c.b16 %v885, %v881
    %v1170 = vpack.c.b16 %v886, %v882
    %v1171 = vpack.c.b16 %v887, %v883
    %v1172 = vpack.c.b16 %v892, %v888
    %v1173 = vpack.c.b16 %v893, %v889
    %v1174 = vpack.c.b16 %v894, %v890
    %v1175 = vpack.c.b16 %v895, %v891
    %v1176 = vpack.c.b16 %v900, %v896
    %v1177 = vpack.c.b16 %v901, %v897
    %v1178 = vpack.c.b16 %v902, %v898
    %v1179 = vpack.c.b16 %v903, %v899
    %v1180 = vpack.c.b16 %v908, %v904
    %v1181 = vpack.c.b16 %v909, %v905
    %v1182 = vpack.c.b16 %v910, %v906
    %v1183 = vpack.c.b16 %v911, %v907
    %v1184 = vpack.c.b16 %v916, %v912
    %v1185 = vpack.c.b16 %v917, %v913
    %v1186 = vpack.c.b16 %v918, %v914
    %v1187 = vpack.c.b16 %v919, %v915
    %v1188 = vpack.c.b16 %v924, %v920
    %v1189 = vpack.c.b16 %v925, %v921
    %v1190 = vpack.c.b16 %v926, %v922
    %v1191 = vpack.c.b16 %v927, %v923
    %v1192 = vpack.c.b16 %v932, %v928
    %v1193 = vpack.c.b16 %v933, %v929
    %v1194 = vpack.c.b16 %v934, %v930
    %v1195 = vpack.c.b16 %v935, %v931
    %v1196 = vpack.c.b16 %v940, %v936
    %v1197 = vpack.c.b16 %v941, %v937
    %v1198 = vpack.c.b16 %v942, %v938
    %v1199 = vpack.c.b16 %v943, %v939
    %v1200 = vpack.c.b16 %v948, %v944
    %v1201 = vpack.c.b16 %v949, %v945
    %v1202 = vpack.c.b16 %v950, %v946
    %v1203 = vpack.c.b16 %v951, %v947
    %v1204 = vpack.c.b16 %v956, %v952
    %v1205 = vpack.c.b16 %v957, %v953
    %v1206 = vpack.c.b16 %v958, %v954
    %v1207 = vpack.c.b16 %v959, %v955
    %v1208 = vpack.c.b16 %v964, %v960
    %v1209 = vpack.c.b16 %v965, %v961
    %v1210 = vpack.c.b16 %v966, %v962
    %v1211 = vpack.c.b16 %v967, %v963
    %v1212 = vpack.c.b16 %v972, %v968
    %v1213 = vpack.c.b16 %v973, %v969
    %v1214 = vpack.c.b16 %v974, %v970
    %v1215 = vpack.c.b16 %v975, %v971
    %v1216 = vpack.c.b16 %v980, %v976
    %v1217 = vpack.c.b16 %v981, %v977
    %v1218 = vpack.c.b16 %v982, %v978
    %v1219 = vpack.c.b16 %v983, %v979
    %v1220 = vpack.c.b16 %v988, %v984
    %v1221 = vpack.c.b16 %v989, %v985
    %v1222 = vpack.c.b16 %v990, %v986
    %v1223 = vpack.c.b16 %v991, %v987
    %v1224 = vpack.c.b16 %v996, %v992
    %v1225 = vpack.c.b16 %v997, %v993
    %v1226 = vpack.c.b16 %v998, %v994
    %v1227 = vpack.c.b16 %v999, %v995
    %v1228 = vpack.c.b16 %v1004, %v1000
    %v1229 = vpack.c.b16 %v1005, %v1001
    %v1230 = vpack.c.b16 %v1006, %v1002
    %v1231 = vpack.c.b16 %v1007, %v1003
    %1456 = vmatpush.bf16.msra.mxu0 %v1036
    %1457 = vmatpush.bf16.msra.mxu0 %v1032
    %1458 = vmatpush.bf16.msra.mxu0 %v1028
    %1459 = vmatpush.bf16.msra.mxu0 %v1024
    %1460 = vmatpush.bf16.msra.mxu0 %v1020
    %1461 = vmatpush.bf16.msra.mxu0 %v1016
    %1462 = vmatpush.bf16.msra.mxu0 %v1012
    %1463 = vmatpush.bf16.msra.mxu0 %v1008
    %1464 = vmatmul.bf16.gmra.mxu0 %v322
    %v1465 = vpop.f32.mrf.mxu0
    %v1466 = vadd.f32 %v292, %v1465
    %v1467 = vpop.f32.mrf.mxu0
    %v1468 = vadd.f32 %v292, %v1467
    %1469 = vdwg.mxu0
    %1470 = vmatpush.bf16.msra.mxu0 %v1068
    %1471 = vmatpush.bf16.msra.mxu0 %v1064
    %1472 = vmatpush.bf16.msra.mxu0 %v1060
    %1473 = vmatpush.bf16.msra.mxu0 %v1056
    %1474 = vmatpush.bf16.msra.mxu0 %v1052
    %1475 = vmatpush.bf16.msra.mxu0 %v1048
    %1476 = vmatpush.bf16.msra.mxu0 %v1044
    %1477 = vmatpush.bf16.msra.mxu0 %v1040
    %1478 = vmatmul.bf16.gmra.mxu0 %v323
    %v1479 = vpop.f32.mrf.mxu0
    %v1480 = vadd.f32 %v1466, %v1479
    %v1481 = vpop.f32.mrf.mxu0
    %v1482 = vadd.f32 %v1468, %v1481
    %1483 = vdwg.mxu0
    %1484 = vmatpush.bf16.msra.mxu0 %v1100
    %1485 = vmatpush.bf16.msra.mxu0 %v1096
    %1486 = vmatpush.bf16.msra.mxu0 %v1092
    %1487 = vmatpush.bf16.msra.mxu0 %v1088
    %1488 = vmatpush.bf16.msra.mxu0 %v1084
    %1489 = vmatpush.bf16.msra.mxu0 %v1080
    %1490 = vmatpush.bf16.msra.mxu0 %v1076
    %1491 = vmatpush.bf16.msra.mxu0 %v1072
    %1492 = vmatmul.bf16.gmra.mxu0 %v324
    %v1493 = vpop.f32.mrf.mxu0
    %v1494 = vadd.f32 %v1480, %v1493
    %v1495 = vpop.f32.mrf.mxu0
    %v1496 = vadd.f32 %v1482, %v1495
    %1497 = vdwg.mxu0
    %1498 = vmatpush.bf16.msra.mxu0 %v1132
    %1499 = vmatpush.bf16.msra.mxu0 %v1128
    %1500 = vmatpush.bf16.msra.mxu0 %v1124
    %1501 = vmatpush.bf16.msra.mxu0 %v1120
    %1502 = vmatpush.bf16.msra.mxu0 %v1116
    %1503 = vmatpush.bf16.msra.mxu0 %v1112
    %1504 = vmatpush.bf16.msra.mxu0 %v1108
    %1505 = vmatpush.bf16.msra.mxu0 %v1104
    %1506 = vmatmul.bf16.gmra.mxu0 %v325
    %v1507 = vpop.f32.mrf.mxu0
    %v1508 = vadd.f32 %v1494, %v1507
    %v1509 = vpop.f32.mrf.mxu0
    %v1510 = vadd.f32 %v1496, %v1509
    %1511 = vdwg.mxu0
    %1512 = vmatpush.bf16.msra.mxu0 %v1164
    %1513 = vmatpush.bf16.msra.mxu0 %v1160
    %1514 = vmatpush.bf16.msra.mxu0 %v1156
    %1515 = vmatpush.bf16.msra.mxu0 %v1152
    %1516 = vmatpush.bf16.msra.mxu0 %v1148
    %1517 = vmatpush.bf16.msra.mxu0 %v1144
    %1518 = vmatpush.bf16.msra.mxu0 %v1140
    %1519 = vmatpush.bf16.msra.mxu0 %v1136
    %1520 = vmatmul.bf16.gmra.mxu0 %v326
    %v1521 = vpop.f32.mrf.mxu0
    %v1522 = vadd.f32 %v1508, %v1521
    %v1523 = vpop.f32.mrf.mxu0
    %v1524 = vadd.f32 %v1510, %v1523
    %1525 = vdwg.mxu0
    %1526 = vmatpush.bf16.msra.mxu0 %v1196
    %1527 = vmatpush.bf16.msra.mxu0 %v1192
    %1528 = vmatpush.bf16.msra.mxu0 %v1188
    %1529 = vmatpush.bf16.msra.mxu0 %v1184
    %1530 = vmatpush.bf16.msra.mxu0 %v1180
    %1531 = vmatpush.bf16.msra.mxu0 %v1176
    %1532 = vmatpush.bf16.msra.mxu0 %v1172
    %1533 = vmatpush.bf16.msra.mxu0 %v1168
    %1534 = vmatmul.bf16.gmra.mxu0 %v327
    %v1535 = vpop.f32.mrf.mxu0
    %v1536 = vadd.f32 %v1522, %v1535
    %v1537 = vpop.f32.mrf.mxu0
    %v1538 = vadd.f32 %v1524, %v1537
    %1539 = vdwg.mxu0
    %1540 = vmatpush.bf16.msra.mxu0 %v1228
    %1541 = vmatpush.bf16.msra.mxu0 %v1224
    %1542 = vmatpush.bf16.msra.mxu0 %v1220
    %1543 = vmatpush.bf16.msra.mxu0 %v1216
    %1544 = vmatpush.bf16.msra.mxu0 %v1212
    %1545 = vmatpush.bf16.msra.mxu0 %v1208
    %1546 = vmatpush.bf16.msra.mxu0 %v1204
    %1547 = vmatpush.bf16.msra.mxu0 %v1200
    %1548 = vmatmul.bf16.gmra.mxu0 %v328
    %v1549 = vpop.f32.mrf.mxu0
    %v1550 = vadd.f32 %v1536, %v1549
    %v1551 = vpop.f32.mrf.mxu0
    %v1552 = vadd.f32 %v1538, %v1551
    %1553 = vdwg.mxu0
    %1554 = vmatpush.bf16.msra.mxu0 %v1037
    %1555 = vmatpush.bf16.msra.mxu0 %v1033
    %1556 = vmatpush.bf16.msra.mxu0 %v1029
    %1557 = vmatpush.bf16.msra.mxu0 %v1025
    %1558 = vmatpush.bf16.msra.mxu0 %v1021
    %1559 = vmatpush.bf16.msra.mxu0 %v1017
    %1560 = vmatpush.bf16.msra.mxu0 %v1013
    %1561 = vmatpush.bf16.msra.mxu0 %v1009
    %1562 = vmatmul.bf16.gmra.mxu0 %v322
    %v1563 = vpop.f32.mrf.mxu0
    %v1564 = vadd.f32 %v293, %v1563
    %v1565 = vpop.f32.mrf.mxu0
    %v1566 = vadd.f32 %v293, %v1565
    %1567 = vdwg.mxu0
    %1568 = vmatpush.bf16.msra.mxu0 %v1069
    %1569 = vmatpush.bf16.msra.mxu0 %v1065
    %1570 = vmatpush.bf16.msra.mxu0 %v1061
    %1571 = vmatpush.bf16.msra.mxu0 %v1057
    %1572 = vmatpush.bf16.msra.mxu0 %v1053
    %1573 = vmatpush.bf16.msra.mxu0 %v1049
    %1574 = vmatpush.bf16.msra.mxu0 %v1045
    %1575 = vmatpush.bf16.msra.mxu0 %v1041
    %1576 = vmatmul.bf16.gmra.mxu0 %v323
    %v1577 = vpop.f32.mrf.mxu0
    %v1578 = vadd.f32 %v1564, %v1577
    %v1579 = vpop.f32.mrf.mxu0
    %v1580 = vadd.f32 %v1566, %v1579
    %1581 = vdwg.mxu0
    %1582 = vmatpush.bf16.msra.mxu0 %v1101
    %1583 = vmatpush.bf16.msra.mxu0 %v1097
    %1584 = vmatpush.bf16.msra.mxu0 %v1093
    %1585 = vmatpush.bf16.msra.mxu0 %v1089
    %1586 = vmatpush.bf16.msra.mxu0 %v1085
    %1587 = vmatpush.bf16.msra.mxu0 %v1081
    %1588 = vmatpush.bf16.msra.mxu0 %v1077
    %1589 = vmatpush.bf16.msra.mxu0 %v1073
    %1590 = vmatmul.bf16.gmra.mxu0 %v324
    %v1591 = vpop.f32.mrf.mxu0
    %v1592 = vadd.f32 %v1578, %v1591
    %v1593 = vpop.f32.mrf.mxu0
    %v1594 = vadd.f32 %v1580, %v1593
    %1595 = vdwg.mxu0
    %1596 = vmatpush.bf16.msra.mxu0 %v1133
    %1597 = vmatpush.bf16.msra.mxu0 %v1129
    %1598 = vmatpush.bf16.msra.mxu0 %v1125
    %1599 = vmatpush.bf16.msra.mxu0 %v1121
    %1600 = vmatpush.bf16.msra.mxu0 %v1117
    %1601 = vmatpush.bf16.msra.mxu0 %v1113
    %1602 = vmatpush.bf16.msra.mxu0 %v1109
    %1603 = vmatpush.bf16.msra.mxu0 %v1105
    %1604 = vmatmul.bf16.gmra.mxu0 %v325
    %v1605 = vpop.f32.mrf.mxu0
    %v1606 = vadd.f32 %v1592, %v1605
    %v1607 = vpop.f32.mrf.mxu0
    %v1608 = vadd.f32 %v1594, %v1607
    %1609 = vdwg.mxu0
    %1610 = vmatpush.bf16.msra.mxu0 %v1165
    %1611 = vmatpush.bf16.msra.mxu0 %v1161
    %1612 = vmatpush.bf16.msra.mxu0 %v1157
    %1613 = vmatpush.bf16.msra.mxu0 %v1153
    %1614 = vmatpush.bf16.msra.mxu0 %v1149
    %1615 = vmatpush.bf16.msra.mxu0 %v1145
    %1616 = vmatpush.bf16.msra.mxu0 %v1141
    %1617 = vmatpush.bf16.msra.mxu0 %v1137
    %1618 = vmatmul.bf16.gmra.mxu0 %v326
    %v1619 = vpop.f32.mrf.mxu0
    %v1620 = vadd.f32 %v1606, %v1619
    %v1621 = vpop.f32.mrf.mxu0
    %v1622 = vadd.f32 %v1608, %v1621
    %1623 = vdwg.mxu0
    %1624 = vmatpush.bf16.msra.mxu0 %v1197
    %1625 = vmatpush.bf16.msra.mxu0 %v1193
    %1626 = vmatpush.bf16.msra.mxu0 %v1189
    %1627 = vmatpush.bf16.msra.mxu0 %v1185
    %1628 = vmatpush.bf16.msra.mxu0 %v1181
    %1629 = vmatpush.bf16.msra.mxu0 %v1177
    %1630 = vmatpush.bf16.msra.mxu0 %v1173
    %1631 = vmatpush.bf16.msra.mxu0 %v1169
    %1632 = vmatmul.bf16.gmra.mxu0 %v327
    %v1633 = vpop.f32.mrf.mxu0
    %v1634 = vadd.f32 %v1620, %v1633
    %v1635 = vpop.f32.mrf.mxu0
    %v1636 = vadd.f32 %v1622, %v1635
    %1637 = vdwg.mxu0
    %1638 = vmatpush.bf16.msra.mxu0 %v1229
    %1639 = vmatpush.bf16.msra.mxu0 %v1225
    %1640 = vmatpush.bf16.msra.mxu0 %v1221
    %1641 = vmatpush.bf16.msra.mxu0 %v1217
    %1642 = vmatpush.bf16.msra.mxu0 %v1213
    %1643 = vmatpush.bf16.msra.mxu0 %v1209
    %1644 = vmatpush.bf16.msra.mxu0 %v1205
    %1645 = vmatpush.bf16.msra.mxu0 %v1201
    %1646 = vmatmul.bf16.gmra.mxu0 %v328
    %v1647 = vpop.f32.mrf.mxu0
    %v1648 = vadd.f32 %v1634, %v1647
    %v1649 = vpop.f32.mrf.mxu0
    %v1650 = vadd.f32 %v1636, %v1649
    %1651 = vdwg.mxu0
    %1652 = vmatpush.bf16.msra.mxu0 %v1038
    %1653 = vmatpush.bf16.msra.mxu0 %v1034
    %1654 = vmatpush.bf16.msra.mxu0 %v1030
    %1655 = vmatpush.bf16.msra.mxu0 %v1026
    %1656 = vmatpush.bf16.msra.mxu0 %v1022
    %1657 = vmatpush.bf16.msra.mxu0 %v1018
    %1658 = vmatpush.bf16.msra.mxu0 %v1014
    %1659 = vmatpush.bf16.msra.mxu0 %v1010
    %1660 = vmatmul.bf16.gmra.mxu0 %v322
    %v1661 = vpop.f32.mrf.mxu0
    %v1662 = vadd.f32 %v294, %v1661
    %v1663 = vpop.f32.mrf.mxu0
    %v1664 = vadd.f32 %v294, %v1663
    %1665 = vdwg.mxu0
    %1666 = vmatpush.bf16.msra.mxu0 %v1070
    %1667 = vmatpush.bf16.msra.mxu0 %v1066
    %1668 = vmatpush.bf16.msra.mxu0 %v1062
    %1669 = vmatpush.bf16.msra.mxu0 %v1058
    %1670 = vmatpush.bf16.msra.mxu0 %v1054
    %1671 = vmatpush.bf16.msra.mxu0 %v1050
    %1672 = vmatpush.bf16.msra.mxu0 %v1046
    %1673 = vmatpush.bf16.msra.mxu0 %v1042
    %1674 = vmatmul.bf16.gmra.mxu0 %v323
    %v1675 = vpop.f32.mrf.mxu0
    %v1676 = vadd.f32 %v1662, %v1675
    %v1677 = vpop.f32.mrf.mxu0
    %v1678 = vadd.f32 %v1664, %v1677
    %1679 = vdwg.mxu0
    %1680 = vmatpush.bf16.msra.mxu0 %v1102
    %1681 = vmatpush.bf16.msra.mxu0 %v1098
    %1682 = vmatpush.bf16.msra.mxu0 %v1094
    %1683 = vmatpush.bf16.msra.mxu0 %v1090
    %1684 = vmatpush.bf16.msra.mxu0 %v1086
    %1685 = vmatpush.bf16.msra.mxu0 %v1082
    %1686 = vmatpush.bf16.msra.mxu0 %v1078
    %1687 = vmatpush.bf16.msra.mxu0 %v1074
    %1688 = vmatmul.bf16.gmra.mxu0 %v324
    %v1689 = vpop.f32.mrf.mxu0
    %v1690 = vadd.f32 %v1676, %v1689
    %v1691 = vpop.f32.mrf.mxu0
    %v1692 = vadd.f32 %v1678, %v1691
    %1693 = vdwg.mxu0
    %1694 = vmatpush.bf16.msra.mxu0 %v1134
    %1695 = vmatpush.bf16.msra.mxu0 %v1130
    %1696 = vmatpush.bf16.msra.mxu0 %v1126
    %1697 = vmatpush.bf16.msra.mxu0 %v1122
    %1698 = vmatpush.bf16.msra.mxu0 %v1118
    %1699 = vmatpush.bf16.msra.mxu0 %v1114
    %1700 = vmatpush.bf16.msra.mxu0 %v1110
    %1701 = vmatpush.bf16.msra.mxu0 %v1106
    %1702 = vmatmul.bf16.gmra.mxu0 %v325
    %v1703 = vpop.f32.mrf.mxu0
    %v1704 = vadd.f32 %v1690, %v1703
    %v1705 = vpop.f32.mrf.mxu0
    %v1706 = vadd.f32 %v1692, %v1705
    %1707 = vdwg.mxu0
    %1708 = vmatpush.bf16.msra.mxu0 %v1166
    %1709 = vmatpush.bf16.msra.mxu0 %v1162
    %1710 = vmatpush.bf16.msra.mxu0 %v1158
    %1711 = vmatpush.bf16.msra.mxu0 %v1154
    %1712 = vmatpush.bf16.msra.mxu0 %v1150
    %1713 = vmatpush.bf16.msra.mxu0 %v1146
    %1714 = vmatpush.bf16.msra.mxu0 %v1142
    %1715 = vmatpush.bf16.msra.mxu0 %v1138
    %1716 = vmatmul.bf16.gmra.mxu0 %v326
    %v1717 = vpop.f32.mrf.mxu0
    %v1718 = vadd.f32 %v1704, %v1717
    %v1719 = vpop.f32.mrf.mxu0
    %v1720 = vadd.f32 %v1706, %v1719
    %1721 = vdwg.mxu0
    %1722 = vmatpush.bf16.msra.mxu0 %v1198
    %1723 = vmatpush.bf16.msra.mxu0 %v1194
    %1724 = vmatpush.bf16.msra.mxu0 %v1190
    %1725 = vmatpush.bf16.msra.mxu0 %v1186
    %1726 = vmatpush.bf16.msra.mxu0 %v1182
    %1727 = vmatpush.bf16.msra.mxu0 %v1178
    %1728 = vmatpush.bf16.msra.mxu0 %v1174
    %1729 = vmatpush.bf16.msra.mxu0 %v1170
    %1730 = vmatmul.bf16.gmra.mxu0 %v327
    %v1731 = vpop.f32.mrf.mxu0
    %v1732 = vadd.f32 %v1718, %v1731
    %v1733 = vpop.f32.mrf.mxu0
    %v1734 = vadd.f32 %v1720, %v1733
    %1735 = vdwg.mxu0
    %1736 = vmatpush.bf16.msra.mxu0 %v1230
    %1737 = vmatpush.bf16.msra.mxu0 %v1226
    %1738 = vmatpush.bf16.msra.mxu0 %v1222
    %1739 = vmatpush.bf16.msra.mxu0 %v1218
    %1740 = vmatpush.bf16.msra.mxu0 %v1214
    %1741 = vmatpush.bf16.msra.mxu0 %v1210
    %1742 = vmatpush.bf16.msra.mxu0 %v1206
    %1743 = vmatpush.bf16.msra.mxu0 %v1202
    %1744 = vmatmul.bf16.gmra.mxu0 %v328
    %v1745 = vpop.f32.mrf.mxu0
    %v1746 = vadd.f32 %v1732, %v1745
    %v1747 = vpop.f32.mrf.mxu0
    %v1748 = vadd.f32 %v1734, %v1747
    %1749 = vdwg.mxu0
    %1750 = vmatpush.bf16.msra.mxu0 %v1039
    %1751 = vmatpush.bf16.msra.mxu0 %v1035
    %1752 = vmatpush.bf16.msra.mxu0 %v1031
    %1753 = vmatpush.bf16.msra.mxu0 %v1027
    %1754 = vmatpush.bf16.msra.mxu0 %v1023
    %1755 = vmatpush.bf16.msra.mxu0 %v1019
    %1756 = vmatpush.bf16.msra.mxu0 %v1015
    %1757 = vmatpush.bf16.msra.mxu0 %v1011
    %1758 = vmatmul.bf16.gmra.mxu0 %v322
    %v1759 = vpop.f32.mrf.mxu0
    %v1760 = vadd.f32 %v295, %v1759
    %v1761 = vpop.f32.mrf.mxu0
    %v1762 = vadd.f32 %v295, %v1761
    %1763 = vdwg.mxu0
    %1764 = vmatpush.bf16.msra.mxu0 %v1071
    %1765 = vmatpush.bf16.msra.mxu0 %v1067
    %1766 = vmatpush.bf16.msra.mxu0 %v1063
    %1767 = vmatpush.bf16.msra.mxu0 %v1059
    %1768 = vmatpush.bf16.msra.mxu0 %v1055
    %1769 = vmatpush.bf16.msra.mxu0 %v1051
    %1770 = vmatpush.bf16.msra.mxu0 %v1047
    %1771 = vmatpush.bf16.msra.mxu0 %v1043
    %1772 = vmatmul.bf16.gmra.mxu0 %v323
    %v1773 = vpop.f32.mrf.mxu0
    %v1774 = vadd.f32 %v1760, %v1773
    %v1775 = vpop.f32.mrf.mxu0
    %v1776 = vadd.f32 %v1762, %v1775
    %1777 = vdwg.mxu0
    %1778 = vmatpush.bf16.msra.mxu0 %v1103
    %1779 = vmatpush.bf16.msra.mxu0 %v1099
    %1780 = vmatpush.bf16.msra.mxu0 %v1095
    %1781 = vmatpush.bf16.msra.mxu0 %v1091
    %1782 = vmatpush.bf16.msra.mxu0 %v1087
    %1783 = vmatpush.bf16.msra.mxu0 %v1083
    %1784 = vmatpush.bf16.msra.mxu0 %v1079
    %1785 = vmatpush.bf16.msra.mxu0 %v1075
    %1786 = vmatmul.bf16.gmra.mxu0 %v324
    %v1787 = vpop.f32.mrf.mxu0
    %v1788 = vadd.f32 %v1774, %v1787
    %v1789 = vpop.f32.mrf.mxu0
    %v1790 = vadd.f32 %v1776, %v1789
    %1791 = vdwg.mxu0
    %1792 = vmatpush.bf16.msra.mxu0 %v1135
    %1793 = vmatpush.bf16.msra.mxu0 %v1131
    %1794 = vmatpush.bf16.msra.mxu0 %v1127
    %1795 = vmatpush.bf16.msra.mxu0 %v1123
    %1796 = vmatpush.bf16.msra.mxu0 %v1119
    %1797 = vmatpush.bf16.msra.mxu0 %v1115
    %1798 = vmatpush.bf16.msra.mxu0 %v1111
    %1799 = vmatpush.bf16.msra.mxu0 %v1107
    %1800 = vmatmul.bf16.gmra.mxu0 %v325
    %v1801 = vpop.f32.mrf.mxu0
    %v1802 = vadd.f32 %v1788, %v1801
    %v1803 = vpop.f32.mrf.mxu0
    %v1804 = vadd.f32 %v1790, %v1803
    %1805 = vdwg.mxu0
    %1806 = vmatpush.bf16.msra.mxu0 %v1167
    %1807 = vmatpush.bf16.msra.mxu0 %v1163
    %1808 = vmatpush.bf16.msra.mxu0 %v1159
    %1809 = vmatpush.bf16.msra.mxu0 %v1155
    %1810 = vmatpush.bf16.msra.mxu0 %v1151
    %1811 = vmatpush.bf16.msra.mxu0 %v1147
    %1812 = vmatpush.bf16.msra.mxu0 %v1143
    %1813 = vmatpush.bf16.msra.mxu0 %v1139
    %1814 = vmatmul.bf16.gmra.mxu0 %v326
    %v1815 = vpop.f32.mrf.mxu0
    %v1816 = vadd.f32 %v1802, %v1815
    %v1817 = vpop.f32.mrf.mxu0
    %v1818 = vadd.f32 %v1804, %v1817
    %1819 = vdwg.mxu0
    %1820 = vmatpush.bf16.msra.mxu0 %v1199
    %1821 = vmatpush.bf16.msra.mxu0 %v1195
    %1822 = vmatpush.bf16.msra.mxu0 %v1191
    %1823 = vmatpush.bf16.msra.mxu0 %v1187
    %1824 = vmatpush.bf16.msra.mxu0 %v1183
    %1825 = vmatpush.bf16.msra.mxu0 %v1179
    %1826 = vmatpush.bf16.msra.mxu0 %v1175
    %1827 = vmatpush.bf16.msra.mxu0 %v1171
    %1828 = vmatmul.bf16.gmra.mxu0 %v327
    %v1829 = vpop.f32.mrf.mxu0
    %v1830 = vadd.f32 %v1816, %v1829
    %v1831 = vpop.f32.mrf.mxu0
    %v1832 = vadd.f32 %v1818, %v1831
    %1833 = vdwg.mxu0
    %1834 = vmatpush.bf16.msra.mxu0 %v1231
    %1835 = vmatpush.bf16.msra.mxu0 %v1227
    %1836 = vmatpush.bf16.msra.mxu0 %v1223
    %1837 = vmatpush.bf16.msra.mxu0 %v1219
    %1838 = vmatpush.bf16.msra.mxu0 %v1215
    %1839 = vmatpush.bf16.msra.mxu0 %v1211
    %1840 = vmatpush.bf16.msra.mxu0 %v1207
    %1841 = vmatpush.bf16.msra.mxu0 %v1203
    %1842 = vmatmul.bf16.gmra.mxu0 %v328
    %v1843 = vpop.f32.mrf.mxu0
    %v1844 = vadd.f32 %v1830, %v1843
    %v1845 = vpop.f32.mrf.mxu0
    %v1846 = vadd.f32 %v1832, %v1845
    %1847 = vdwg.mxu0
    %v1848 = vmax.f32 %v1550, 0.0
    %v1849 = vmax.f32 %v1648, 0.0
    %v1850 = vmax.f32 %v1746, 0.0
    %v1851 = vmax.f32 %v1844, 0.0
    %v1852 = vmax.f32 %v1552, 0.0
    %v1853 = vmax.f32 %v1650, 0.0
    %v1854 = vmax.f32 %v1748, 0.0
    %v1855 = vmax.f32 %v1846, 0.0
    %v1856 = vpack.c.bf16 %v1852, %v1848
    %v1857 = vpack.c.bf16 %v1853, %v1849
    %v1858 = vpack.c.bf16 %v1854, %v1850
    %v1859 = vpack.c.bf16 %v1855, %v1851
    %v1860 = vld [vmem:[#allocation4] sm:$0xff]
    %v1861 = vld [vmem:[#allocation4 + $0x8] sm:$0xff]
    %v1862 = vld [vmem:[#allocation4 + $0x10] sm:$0xff]
    %v1863 = vld [vmem:[#allocation4 + $0x18] sm:$0xff]
    %v1864 = vld [vmem:[#allocation4 + $0x20] sm:$0xff]
    %v1865 = vld [vmem:[#allocation4 + $0x28] sm:$0xff]
    %v1866 = vld [vmem:[#allocation4 + $0x30] sm:$0xff]
    %v1867 = vld [vmem:[#allocation4 + $0x38] sm:$0xff]
    %v1868 = vld [vmem:[#allocation4 + $0x40] sm:$0xff]
    %v1869 = vld [vmem:[#allocation4 + $0x48] sm:$0xff]
    %v1870 = vld [vmem:[#allocation4 + $0x50] sm:$0xff]
    %v1871 = vld [vmem:[#allocation4 + $0x58] sm:$0xff]
    %v1872 = vld [vmem:[#allocation4 + $0x60] sm:$0xff]
    %v1873 = vld [vmem:[#allocation4 + $0x68] sm:$0xff]
    %v1874 = vld [vmem:[#allocation4 + $0x70] sm:$0xff]
    %v1875 = vld [vmem:[#allocation4 + $0x78] sm:$0xff]
    %v1876 = vld [vmem:[#allocation4 + $0x80] sm:$0xff]
    %v1877 = vld [vmem:[#allocation4 + $0x88] sm:$0xff]
    %v1878 = vld [vmem:[#allocation4 + $0x90] sm:$0xff]
    %v1879 = vld [vmem:[#allocation4 + $0x98] sm:$0xff]
    %v1880 = vld [vmem:[#allocation4 + $0xa0] sm:$0xff]
    %v1881 = vld [vmem:[#allocation4 + $0xa8] sm:$0xff]
    %v1882 = vld [vmem:[#allocation4 + $0xb0] sm:$0xff]
    %v1883 = vld [vmem:[#allocation4 + $0xb8] sm:$0xff]
    %v1884 = vld [vmem:[#allocation4 + $0xc0] sm:$0xff]
    %v1885 = vld [vmem:[#allocation4 + $0xc8] sm:$0xff]
    %v1886 = vld [vmem:[#allocation4 + $0xd0] sm:$0xff]
    %v1887 = vld [vmem:[#allocation4 + $0xd8] sm:$0xff]
    %v1888 = vld [vmem:[#allocation4 + $0xe0] sm:$0xff]
    %v1889 = vld [vmem:[#allocation4 + $0xe8] sm:$0xff]
    %v1890 = vld [vmem:[#allocation4 + $0xf0] sm:$0xff]
    %v1891 = vld [vmem:[#allocation4 + $0xf8] sm:$0xff]
    %v1892 = vld [vmem:[#allocation4 + $0x100] sm:$0xff]
    %v1893 = vld [vmem:[#allocation4 + $0x108] sm:$0xff]
    %v1894 = vld [vmem:[#allocation4 + $0x110] sm:$0xff]
    %v1895 = vld [vmem:[#allocation4 + $0x118] sm:$0xff]
    %v1896 = vld [vmem:[#allocation4 + $0x120] sm:$0xff]
    %v1897 = vld [vmem:[#allocation4 + $0x128] sm:$0xff]
    %v1898 = vld [vmem:[#allocation4 + $0x130] sm:$0xff]
    %v1899 = vld [vmem:[#allocation4 + $0x138] sm:$0xff]
    %v1900 = vld [vmem:[#allocation4 + $0x140] sm:$0xff]
    %v1901 = vld [vmem:[#allocation4 + $0x148] sm:$0xff]
    %v1902 = vld [vmem:[#allocation4 + $0x150] sm:$0xff]
    %v1903 = vld [vmem:[#allocation4 + $0x158] sm:$0xff]
    %v1904 = vld [vmem:[#allocation4 + $0x160] sm:$0xff]
    %v1905 = vld [vmem:[#allocation4 + $0x168] sm:$0xff]
    %v1906 = vld [vmem:[#allocation4 + $0x170] sm:$0xff]
    %v1907 = vld [vmem:[#allocation4 + $0x178] sm:$0xff]
    %v1908 = vld [vmem:[#allocation4 + $0x180] sm:$0xff]
    %v1909 = vld [vmem:[#allocation4 + $0x188] sm:$0xff]
    %v1910 = vld [vmem:[#allocation4 + $0x190] sm:$0xff]
    %v1911 = vld [vmem:[#allocation4 + $0x198] sm:$0xff]
    %v1912 = vld [vmem:[#allocation4 + $0x1a0] sm:$0xff]
    %v1913 = vld [vmem:[#allocation4 + $0x1a8] sm:$0xff]
    %v1914 = vld [vmem:[#allocation4 + $0x1b0] sm:$0xff]
    %v1915 = vld [vmem:[#allocation4 + $0x1b8] sm:$0xff]
    %v1916 = vld [vmem:[#allocation4 + $0x1c0] sm:$0xff]
    %v1917 = vld [vmem:[#allocation4 + $0x1c8] sm:$0xff]
    %v1918 = vld [vmem:[#allocation4 + $0x1d0] sm:$0xff]
    %v1919 = vld [vmem:[#allocation4 + $0x1d8] sm:$0xff]
    %v1920 = vld [vmem:[#allocation4 + $0x1e0] sm:$0xff]
    %v1921 = vld [vmem:[#allocation4 + $0x1e8] sm:$0xff]
    %v1922 = vld [vmem:[#allocation4 + $0x1f0] sm:$0xff]
    %v1923 = vld [vmem:[#allocation4 + $0x1f8] sm:$0xff]
    %v1924 = vld [vmem:[#allocation4 + $0x200] sm:$0xff]
    %v1925 = vld [vmem:[#allocation4 + $0x208] sm:$0xff]
    %v1926 = vld [vmem:[#allocation4 + $0x210] sm:$0xff]
    %v1927 = vld [vmem:[#allocation4 + $0x218] sm:$0xff]
    %v1928 = vld [vmem:[#allocation4 + $0x220] sm:$0xff]
    %v1929 = vld [vmem:[#allocation4 + $0x228] sm:$0xff]
    %v1930 = vld [vmem:[#allocation4 + $0x230] sm:$0xff]
    %v1931 = vld [vmem:[#allocation4 + $0x238] sm:$0xff]
    %v1932 = vld [vmem:[#allocation4 + $0x240] sm:$0xff]
    %v1933 = vld [vmem:[#allocation4 + $0x248] sm:$0xff]
    %v1934 = vld [vmem:[#allocation4 + $0x250] sm:$0xff]
    %v1935 = vld [vmem:[#allocation4 + $0x258] sm:$0xff]
    %v1936 = vld [vmem:[#allocation4 + $0x260] sm:$0xff]
    %v1937 = vld [vmem:[#allocation4 + $0x268] sm:$0xff]
    %v1938 = vld [vmem:[#allocation4 + $0x270] sm:$0xff]
    %v1939 = vld [vmem:[#allocation4 + $0x278] sm:$0xff]
    %v1940 = vld [vmem:[#allocation4 + $0x280] sm:$0xff]
    %v1941 = vld [vmem:[#allocation4 + $0x288] sm:$0xff]
    %v1942 = vld [vmem:[#allocation4 + $0x290] sm:$0xff]
    %v1943 = vld [vmem:[#allocation4 + $0x298] sm:$0xff]
    %v1944 = vld [vmem:[#allocation4 + $0x2a0] sm:$0xff]
    %v1945 = vld [vmem:[#allocation4 + $0x2a8] sm:$0xff]
    %v1946 = vld [vmem:[#allocation4 + $0x2b0] sm:$0xff]
    %v1947 = vld [vmem:[#allocation4 + $0x2b8] sm:$0xff]
    %v1948 = vld [vmem:[#allocation4 + $0x2c0] sm:$0xff]
    %v1949 = vld [vmem:[#allocation4 + $0x2c8] sm:$0xff]
    %v1950 = vld [vmem:[#allocation4 + $0x2d0] sm:$0xff]
    %v1951 = vld [vmem:[#allocation4 + $0x2d8] sm:$0xff]
    %v1952 = vld [vmem:[#allocation4 + $0x2e0] sm:$0xff]
    %v1953 = vld [vmem:[#allocation4 + $0x2e8] sm:$0xff]
    %v1954 = vld [vmem:[#allocation4 + $0x2f0] sm:$0xff]
    %v1955 = vld [vmem:[#allocation4 + $0x2f8] sm:$0xff]
    %v1956 = vld [vmem:[#allocation4 + $0x300] sm:$0xff]
    %v1957 = vld [vmem:[#allocation4 + $0x308] sm:$0xff]
    %v1958 = vld [vmem:[#allocation4 + $0x310] sm:$0xff]
    %v1959 = vld [vmem:[#allocation4 + $0x318] sm:$0xff]
    %v1960 = vld [vmem:[#allocation4 + $0x320] sm:$0xff]
    %v1961 = vld [vmem:[#allocation4 + $0x328] sm:$0xff]
    %v1962 = vld [vmem:[#allocation4 + $0x330] sm:$0xff]
    %v1963 = vld [vmem:[#allocation4 + $0x338] sm:$0xff]
    %v1964 = vld [vmem:[#allocation4 + $0x340] sm:$0xff]
    %v1965 = vld [vmem:[#allocation4 + $0x348] sm:$0xff]
    %v1966 = vld [vmem:[#allocation4 + $0x350] sm:$0xff]
    %v1967 = vld [vmem:[#allocation4 + $0x358] sm:$0xff]
    %v1968 = vld [vmem:[#allocation4 + $0x360] sm:$0xff]
    %v1969 = vld [vmem:[#allocation4 + $0x368] sm:$0xff]
    %v1970 = vld [vmem:[#allocation4 + $0x370] sm:$0xff]
    %v1971 = vld [vmem:[#allocation4 + $0x378] sm:$0xff]
    %v1972 = vld [vmem:[#allocation4 + $0x380] sm:$0xff]
    %v1973 = vld [vmem:[#allocation4 + $0x388] sm:$0xff]
    %v1974 = vld [vmem:[#allocation4 + $0x390] sm:$0xff]
    %v1975 = vld [vmem:[#allocation4 + $0x398] sm:$0xff]
    %v1976 = vld [vmem:[#allocation4 + $0x3a0] sm:$0xff]
    %v1977 = vld [vmem:[#allocation4 + $0x3a8] sm:$0xff]
    %v1978 = vld [vmem:[#allocation4 + $0x3b0] sm:$0xff]
    %v1979 = vld [vmem:[#allocation4 + $0x3b8] sm:$0xff]
    %v1980 = vld [vmem:[#allocation4 + $0x3c0] sm:$0xff]
    %v1981 = vld [vmem:[#allocation4 + $0x3c8] sm:$0xff]
    %v1982 = vld [vmem:[#allocation4 + $0x3d0] sm:$0xff]
    %v1983 = vld [vmem:[#allocation4 + $0x3d8] sm:$0xff]
    %v1984 = vld [vmem:[#allocation4 + $0x3e0] sm:$0xff]
    %v1985 = vld [vmem:[#allocation4 + $0x3e8] sm:$0xff]
    %v1986 = vld [vmem:[#allocation4 + $0x3f0] sm:$0xff]
    %v1987 = vld [vmem:[#allocation4 + $0x3f8] sm:$0xff]
    %v1988 = vld [vmem:[%s4] sm:$0xf]
    %v1990 = vperm.slane %v1988, 0
    %v1991 = vperm.slane %v1988, 1
    %v1992 = vperm.slane %v1988, 2
    %v1993 = vperm.slane %v1988, 3
    %v2126 = vunpack.c.l.b16 %v1860
    %v2127 = vunpack.c.h.b16 %v1860
    %v2128 = vunpack.c.l.b16 %v1861
    %v2129 = vunpack.c.h.b16 %v1861
    %v2130 = vunpack.c.l.b16 %v1862
    %v2131 = vunpack.c.h.b16 %v1862
    %v2132 = vunpack.c.l.b16 %v1863
    %v2133 = vunpack.c.h.b16 %v1863
    %v2134 = vunpack.c.l.b16 %v1864
    %v2135 = vunpack.c.h.b16 %v1864
    %v2136 = vunpack.c.l.b16 %v1865
    %v2137 = vunpack.c.h.b16 %v1865
    %v2138 = vunpack.c.l.b16 %v1866
    %v2139 = vunpack.c.h.b16 %v1866
    %v2140 = vunpack.c.l.b16 %v1867
    %v2141 = vunpack.c.h.b16 %v1867
    %v2142 = vunpack.c.l.b16 %v1868
    %v2143 = vunpack.c.h.b16 %v1868
    %v2144 = vunpack.c.l.b16 %v1869
    %v2145 = vunpack.c.h.b16 %v1869
    %v2146 = vunpack.c.l.b16 %v1870
    %v2147 = vunpack.c.h.b16 %v1870
    %v2148 = vunpack.c.l.b16 %v1871
    %v2149 = vunpack.c.h.b16 %v1871
    %v2150 = vunpack.c.l.b16 %v1872
    %v2151 = vunpack.c.h.b16 %v1872
    %v2152 = vunpack.c.l.b16 %v1873
    %v2153 = vunpack.c.h.b16 %v1873
    %v2154 = vunpack.c.l.b16 %v1874
    %v2155 = vunpack.c.h.b16 %v1874
    %v2156 = vunpack.c.l.b16 %v1875
    %v2157 = vunpack.c.h.b16 %v1875
    %v2158 = vunpack.c.l.b16 %v1876
    %v2159 = vunpack.c.h.b16 %v1876
    %v2160 = vunpack.c.l.b16 %v1877
    %v2161 = vunpack.c.h.b16 %v1877
    %v2162 = vunpack.c.l.b16 %v1878
    %v2163 = vunpack.c.h.b16 %v1878
    %v2164 = vunpack.c.l.b16 %v1879
    %v2165 = vunpack.c.h.b16 %v1879
    %v2166 = vunpack.c.l.b16 %v1880
    %v2167 = vunpack.c.h.b16 %v1880
    %v2168 = vunpack.c.l.b16 %v1881
    %v2169 = vunpack.c.h.b16 %v1881
    %v2170 = vunpack.c.l.b16 %v1882
    %v2171 = vunpack.c.h.b16 %v1882
    %v2172 = vunpack.c.l.b16 %v1883
    %v2173 = vunpack.c.h.b16 %v1883
    %v2174 = vunpack.c.l.b16 %v1884
    %v2175 = vunpack.c.h.b16 %v1884
    %v2176 = vunpack.c.l.b16 %v1885
    %v2177 = vunpack.c.h.b16 %v1885
    %v2178 = vunpack.c.l.b16 %v1886
    %v2179 = vunpack.c.h.b16 %v1886
    %v2180 = vunpack.c.l.b16 %v1887
    %v2181 = vunpack.c.h.b16 %v1887
    %v2182 = vunpack.c.l.b16 %v1888
    %v2183 = vunpack.c.h.b16 %v1888
    %v2184 = vunpack.c.l.b16 %v1889
    %v2185 = vunpack.c.h.b16 %v1889
    %v2186 = vunpack.c.l.b16 %v1890
    %v2187 = vunpack.c.h.b16 %v1890
    %v2188 = vunpack.c.l.b16 %v1891
    %v2189 = vunpack.c.h.b16 %v1891
    %v2190 = vunpack.c.l.b16 %v1892
    %v2191 = vunpack.c.h.b16 %v1892
    %v2192 = vunpack.c.l.b16 %v1893
    %v2193 = vunpack.c.h.b16 %v1893
    %v2194 = vunpack.c.l.b16 %v1894
    %v2195 = vunpack.c.h.b16 %v1894
    %v2196 = vunpack.c.l.b16 %v1895
    %v2197 = vunpack.c.h.b16 %v1895
    %v2198 = vunpack.c.l.b16 %v1896
    %v2199 = vunpack.c.h.b16 %v1896
    %v2200 = vunpack.c.l.b16 %v1897
    %v2201 = vunpack.c.h.b16 %v1897
    %v2202 = vunpack.c.l.b16 %v1898
    %v2203 = vunpack.c.h.b16 %v1898
    %v2204 = vunpack.c.l.b16 %v1899
    %v2205 = vunpack.c.h.b16 %v1899
    %v2206 = vunpack.c.l.b16 %v1900
    %v2207 = vunpack.c.h.b16 %v1900
    %v2208 = vunpack.c.l.b16 %v1901
    %v2209 = vunpack.c.h.b16 %v1901
    %v2210 = vunpack.c.l.b16 %v1902
    %v2211 = vunpack.c.h.b16 %v1902
    %v2212 = vunpack.c.l.b16 %v1903
    %v2213 = vunpack.c.h.b16 %v1903
    %v2214 = vunpack.c.l.b16 %v1904
    %v2215 = vunpack.c.h.b16 %v1904
    %v2216 = vunpack.c.l.b16 %v1905
    %v2217 = vunpack.c.h.b16 %v1905
    %v2218 = vunpack.c.l.b16 %v1906
    %v2219 = vunpack.c.h.b16 %v1906
    %v2220 = vunpack.c.l.b16 %v1907
    %v2221 = vunpack.c.h.b16 %v1907
    %v2222 = vunpack.c.l.b16 %v1908
    %v2223 = vunpack.c.h.b16 %v1908
    %v2224 = vunpack.c.l.b16 %v1909
    %v2225 = vunpack.c.h.b16 %v1909
    %v2226 = vunpack.c.l.b16 %v1910
    %v2227 = vunpack.c.h.b16 %v1910
    %v2228 = vunpack.c.l.b16 %v1911
    %v2229 = vunpack.c.h.b16 %v1911
    %v2230 = vunpack.c.l.b16 %v1912
    %v2231 = vunpack.c.h.b16 %v1912
    %v2232 = vunpack.c.l.b16 %v1913
    %v2233 = vunpack.c.h.b16 %v1913
    %v2234 = vunpack.c.l.b16 %v1914
    %v2235 = vunpack.c.h.b16 %v1914
    %v2236 = vunpack.c.l.b16 %v1915
    %v2237 = vunpack.c.h.b16 %v1915
    %v2238 = vunpack.c.l.b16 %v1916
    %v2239 = vunpack.c.h.b16 %v1916
    %v2240 = vunpack.c.l.b16 %v1917
    %v2241 = vunpack.c.h.b16 %v1917
    %v2242 = vunpack.c.l.b16 %v1918
    %v2243 = vunpack.c.h.b16 %v1918
    %v2244 = vunpack.c.l.b16 %v1919
    %v2245 = vunpack.c.h.b16 %v1919
    %v2246 = vunpack.c.l.b16 %v1920
    %v2247 = vunpack.c.h.b16 %v1920
    %v2248 = vunpack.c.l.b16 %v1921
    %v2249 = vunpack.c.h.b16 %v1921
    %v2250 = vunpack.c.l.b16 %v1922
    %v2251 = vunpack.c.h.b16 %v1922
    %v2252 = vunpack.c.l.b16 %v1923
    %v2253 = vunpack.c.h.b16 %v1923
    %v2254 = vunpack.c.l.b16 %v1924
    %v2255 = vunpack.c.h.b16 %v1924
    %v2256 = vunpack.c.l.b16 %v1925
    %v2257 = vunpack.c.h.b16 %v1925
    %v2258 = vunpack.c.l.b16 %v1926
    %v2259 = vunpack.c.h.b16 %v1926
    %v2260 = vunpack.c.l.b16 %v1927
    %v2261 = vunpack.c.h.b16 %v1927
    %v2262 = vunpack.c.l.b16 %v1928
    %v2263 = vunpack.c.h.b16 %v1928
    %v2264 = vunpack.c.l.b16 %v1929
    %v2265 = vunpack.c.h.b16 %v1929
    %v2266 = vunpack.c.l.b16 %v1930
    %v2267 = vunpack.c.h.b16 %v1930
    %v2268 = vunpack.c.l.b16 %v1931
    %v2269 = vunpack.c.h.b16 %v1931
    %v2270 = vunpack.c.l.b16 %v1932
    %v2271 = vunpack.c.h.b16 %v1932
    %v2272 = vunpack.c.l.b16 %v1933
    %v2273 = vunpack.c.h.b16 %v1933
    %v2274 = vunpack.c.l.b16 %v1934
    %v2275 = vunpack.c.h.b16 %v1934
    %v2276 = vunpack.c.l.b16 %v1935
    %v2277 = vunpack.c.h.b16 %v1935
    %v2278 = vunpack.c.l.b16 %v1936
    %v2279 = vunpack.c.h.b16 %v1936
    %v2280 = vunpack.c.l.b16 %v1937
    %v2281 = vunpack.c.h.b16 %v1937
    %v2282 = vunpack.c.l.b16 %v1938
    %v2283 = vunpack.c.h.b16 %v1938
    %v2284 = vunpack.c.l.b16 %v1939
    %v2285 = vunpack.c.h.b16 %v1939
    %v2286 = vunpack.c.l.b16 %v1940
    %v2287 = vunpack.c.h.b16 %v1940
    %v2288 = vunpack.c.l.b16 %v1941
    %v2289 = vunpack.c.h.b16 %v1941
    %v2290 = vunpack.c.l.b16 %v1942
    %v2291 = vunpack.c.h.b16 %v1942
    %v2292 = vunpack.c.l.b16 %v1943
    %v2293 = vunpack.c.h.b16 %v1943
    %v2294 = vunpack.c.l.b16 %v1944
    %v2295 = vunpack.c.h.b16 %v1944
    %v2296 = vunpack.c.l.b16 %v1945
    %v2297 = vunpack.c.h.b16 %v1945
    %v2298 = vunpack.c.l.b16 %v1946
    %v2299 = vunpack.c.h.b16 %v1946
    %v2300 = vunpack.c.l.b16 %v1947
    %v2301 = vunpack.c.h.b16 %v1947
    %v2302 = vunpack.c.l.b16 %v1948
    %v2303 = vunpack.c.h.b16 %v1948
    %v2304 = vunpack.c.l.b16 %v1949
    %v2305 = vunpack.c.h.b16 %v1949
    %v2306 = vunpack.c.l.b16 %v1950
    %v2307 = vunpack.c.h.b16 %v1950
    %v2308 = vunpack.c.l.b16 %v1951
    %v2309 = vunpack.c.h.b16 %v1951
    %v2310 = vunpack.c.l.b16 %v1952
    %v2311 = vunpack.c.h.b16 %v1952
    %v2312 = vunpack.c.l.b16 %v1953
    %v2313 = vunpack.c.h.b16 %v1953
    %v2314 = vunpack.c.l.b16 %v1954
    %v2315 = vunpack.c.h.b16 %v1954
    %v2316 = vunpack.c.l.b16 %v1955
    %v2317 = vunpack.c.h.b16 %v1955
    %v2318 = vunpack.c.l.b16 %v1956
    %v2319 = vunpack.c.h.b16 %v1956
    %v2320 = vunpack.c.l.b16 %v1957
    %v2321 = vunpack.c.h.b16 %v1957
    %v2322 = vunpack.c.l.b16 %v1958
    %v2323 = vunpack.c.h.b16 %v1958
    %v2324 = vunpack.c.l.b16 %v1959
    %v2325 = vunpack.c.h.b16 %v1959
    %v2326 = vunpack.c.l.b16 %v1960
    %v2327 = vunpack.c.h.b16 %v1960
    %v2328 = vunpack.c.l.b16 %v1961
    %v2329 = vunpack.c.h.b16 %v1961
    %v2330 = vunpack.c.l.b16 %v1962
    %v2331 = vunpack.c.h.b16 %v1962
    %v2332 = vunpack.c.l.b16 %v1963
    %v2333 = vunpack.c.h.b16 %v1963
    %v2334 = vunpack.c.l.b16 %v1964
    %v2335 = vunpack.c.h.b16 %v1964
    %v2336 = vunpack.c.l.b16 %v1965
    %v2337 = vunpack.c.h.b16 %v1965
    %v2338 = vunpack.c.l.b16 %v1966
    %v2339 = vunpack.c.h.b16 %v1966
    %v2340 = vunpack.c.l.b16 %v1967
    %v2341 = vunpack.c.h.b16 %v1967
    %v2342 = vunpack.c.l.b16 %v1968
    %v2343 = vunpack.c.h.b16 %v1968
    %v2344 = vunpack.c.l.b16 %v1969
    %v2345 = vunpack.c.h.b16 %v1969
    %v2346 = vunpack.c.l.b16 %v1970
    %v2347 = vunpack.c.h.b16 %v1970
    %v2348 = vunpack.c.l.b16 %v1971
    %v2349 = vunpack.c.h.b16 %v1971
    %v2350 = vunpack.c.l.b16 %v1972
    %v2351 = vunpack.c.h.b16 %v1972
    %v2352 = vunpack.c.l.b16 %v1973
    %v2353 = vunpack.c.h.b16 %v1973
    %v2354 = vunpack.c.l.b16 %v1974
    %v2355 = vunpack.c.h.b16 %v1974
    %v2356 = vunpack.c.l.b16 %v1975
    %v2357 = vunpack.c.h.b16 %v1975
    %v2358 = vunpack.c.l.b16 %v1976
    %v2359 = vunpack.c.h.b16 %v1976
    %v2360 = vunpack.c.l.b16 %v1977
    %v2361 = vunpack.c.h.b16 %v1977
    %v2362 = vunpack.c.l.b16 %v1978
    %v2363 = vunpack.c.h.b16 %v1978
    %v2364 = vunpack.c.l.b16 %v1979
    %v2365 = vunpack.c.h.b16 %v1979
    %v2366 = vunpack.c.l.b16 %v1980
    %v2367 = vunpack.c.h.b16 %v1980
    %v2368 = vunpack.c.l.b16 %v1981
    %v2369 = vunpack.c.h.b16 %v1981
    %v2370 = vunpack.c.l.b16 %v1982
    %v2371 = vunpack.c.h.b16 %v1982
    %v2372 = vunpack.c.l.b16 %v1983
    %v2373 = vunpack.c.h.b16 %v1983
    %v2374 = vunpack.c.l.b16 %v1984
    %v2375 = vunpack.c.h.b16 %v1984
    %v2376 = vunpack.c.l.b16 %v1985
    %v2377 = vunpack.c.h.b16 %v1985
    %v2378 = vunpack.c.l.b16 %v1986
    %v2379 = vunpack.c.h.b16 %v1986
    %v2380 = vunpack.c.l.b16 %v1987
    %v2381 = vunpack.c.h.b16 %v1987
    %v2382 = vpack.c.b16 %v2130, %v2126
    %v2383 = vpack.c.b16 %v2131, %v2127
    %v2384 = vpack.c.b16 %v2132, %v2128
    %v2385 = vpack.c.b16 %v2133, %v2129
    %v2386 = vpack.c.b16 %v2138, %v2134
    %v2387 = vpack.c.b16 %v2139, %v2135
    %v2388 = vpack.c.b16 %v2140, %v2136
    %v2389 = vpack.c.b16 %v2141, %v2137
    %v2390 = vpack.c.b16 %v2146, %v2142
    %v2391 = vpack.c.b16 %v2147, %v2143
    %v2392 = vpack.c.b16 %v2148, %v2144
    %v2393 = vpack.c.b16 %v2149, %v2145
    %v2394 = vpack.c.b16 %v2154, %v2150
    %v2395 = vpack.c.b16 %v2155, %v2151
    %v2396 = vpack.c.b16 %v2156, %v2152
    %v2397 = vpack.c.b16 %v2157, %v2153
    %v2398 = vpack.c.b16 %v2162, %v2158
    %v2399 = vpack.c.b16 %v2163, %v2159
    %v2400 = vpack.c.b16 %v2164, %v2160
    %v2401 = vpack.c.b16 %v2165, %v2161
    %v2402 = vpack.c.b16 %v2170, %v2166
    %v2403 = vpack.c.b16 %v2171, %v2167
    %v2404 = vpack.c.b16 %v2172, %v2168
    %v2405 = vpack.c.b16 %v2173, %v2169
    %v2406 = vpack.c.b16 %v2178, %v2174
    %v2407 = vpack.c.b16 %v2179, %v2175
    %v2408 = vpack.c.b16 %v2180, %v2176
    %v2409 = vpack.c.b16 %v2181, %v2177
    %v2410 = vpack.c.b16 %v2186, %v2182
    %v2411 = vpack.c.b16 %v2187, %v2183
    %v2412 = vpack.c.b16 %v2188, %v2184
    %v2413 = vpack.c.b16 %v2189, %v2185
    %v2414 = vpack.c.b16 %v2194, %v2190
    %v2415 = vpack.c.b16 %v2195, %v2191
    %v2416 = vpack.c.b16 %v2196, %v2192
    %v2417 = vpack.c.b16 %v2197, %v2193
    %v2418 = vpack.c.b16 %v2202, %v2198
    %v2419 = vpack.c.b16 %v2203, %v2199
    %v2420 = vpack.c.b16 %v2204, %v2200
    %v2421 = vpack.c.b16 %v2205, %v2201
    %v2422 = vpack.c.b16 %v2210, %v2206
    %v2423 = vpack.c.b16 %v2211, %v2207
    %v2424 = vpack.c.b16 %v2212, %v2208
    %v2425 = vpack.c.b16 %v2213, %v2209
    %v2426 = vpack.c.b16 %v2218, %v2214
    %v2427 = vpack.c.b16 %v2219, %v2215
    %v2428 = vpack.c.b16 %v2220, %v2216
    %v2429 = vpack.c.b16 %v2221, %v2217
    %v2430 = vpack.c.b16 %v2226, %v2222
    %v2431 = vpack.c.b16 %v2227, %v2223
    %v2432 = vpack.c.b16 %v2228, %v2224
    %v2433 = vpack.c.b16 %v2229, %v2225
    %v2434 = vpack.c.b16 %v2234, %v2230
    %v2435 = vpack.c.b16 %v2235, %v2231
    %v2436 = vpack.c.b16 %v2236, %v2232
    %v2437 = vpack.c.b16 %v2237, %v2233
    %v2438 = vpack.c.b16 %v2242, %v2238
    %v2439 = vpack.c.b16 %v2243, %v2239
    %v2440 = vpack.c.b16 %v2244, %v2240
    %v2441 = vpack.c.b16 %v2245, %v2241
    %v2442 = vpack.c.b16 %v2250, %v2246
    %v2443 = vpack.c.b16 %v2251, %v2247
    %v2444 = vpack.c.b16 %v2252, %v2248
    %v2445 = vpack.c.b16 %v2253, %v2249
    %v2446 = vpack.c.b16 %v2258, %v2254
    %v2447 = vpack.c.b16 %v2259, %v2255
    %v2448 = vpack.c.b16 %v2260, %v2256
    %v2449 = vpack.c.b16 %v2261, %v2257
    %v2450 = vpack.c.b16 %v2266, %v2262
    %v2451 = vpack.c.b16 %v2267, %v2263
    %v2452 = vpack.c.b16 %v2268, %v2264
    %v2453 = vpack.c.b16 %v2269, %v2265
    %v2454 = vpack.c.b16 %v2274, %v2270
    %v2455 = vpack.c.b16 %v2275, %v2271
    %v2456 = vpack.c.b16 %v2276, %v2272
    %v2457 = vpack.c.b16 %v2277, %v2273
    %v2458 = vpack.c.b16 %v2282, %v2278
    %v2459 = vpack.c.b16 %v2283, %v2279
    %v2460 = vpack.c.b16 %v2284, %v2280
    %v2461 = vpack.c.b16 %v2285, %v2281
    %v2462 = vpack.c.b16 %v2290, %v2286
    %v2463 = vpack.c.b16 %v2291, %v2287
    %v2464 = vpack.c.b16 %v2292, %v2288
    %v2465 = vpack.c.b16 %v2293, %v2289
    %v2466 = vpack.c.b16 %v2298, %v2294
    %v2467 = vpack.c.b16 %v2299, %v2295
    %v2468 = vpack.c.b16 %v2300, %v2296
    %v2469 = vpack.c.b16 %v2301, %v2297
    %v2470 = vpack.c.b16 %v2306, %v2302
    %v2471 = vpack.c.b16 %v2307, %v2303
    %v2472 = vpack.c.b16 %v2308, %v2304
    %v2473 = vpack.c.b16 %v2309, %v2305
    %v2474 = vpack.c.b16 %v2314, %v2310
    %v2475 = vpack.c.b16 %v2315, %v2311
    %v2476 = vpack.c.b16 %v2316, %v2312
    %v2477 = vpack.c.b16 %v2317, %v2313
    %v2478 = vpack.c.b16 %v2322, %v2318
    %v2479 = vpack.c.b16 %v2323, %v2319
    %v2480 = vpack.c.b16 %v2324, %v2320
    %v2481 = vpack.c.b16 %v2325, %v2321
    %v2482 = vpack.c.b16 %v2330, %v2326
    %v2483 = vpack.c.b16 %v2331, %v2327
    %v2484 = vpack.c.b16 %v2332, %v2328
    %v2485 = vpack.c.b16 %v2333, %v2329
    %v2486 = vpack.c.b16 %v2338, %v2334
    %v2487 = vpack.c.b16 %v2339, %v2335
    %v2488 = vpack.c.b16 %v2340, %v2336
    %v2489 = vpack.c.b16 %v2341, %v2337
    %v2490 = vpack.c.b16 %v2346, %v2342
    %v2491 = vpack.c.b16 %v2347, %v2343
    %v2492 = vpack.c.b16 %v2348, %v2344
    %v2493 = vpack.c.b16 %v2349, %v2345
    %v2494 = vpack.c.b16 %v2354, %v2350
    %v2495 = vpack.c.b16 %v2355, %v2351
    %v2496 = vpack.c.b16 %v2356, %v2352
    %v2497 = vpack.c.b16 %v2357, %v2353
    %v2498 = vpack.c.b16 %v2362, %v2358
    %v2499 = vpack.c.b16 %v2363, %v2359
    %v2500 = vpack.c.b16 %v2364, %v2360
    %v2501 = vpack.c.b16 %v2365, %v2361
    %v2502 = vpack.c.b16 %v2370, %v2366
    %v2503 = vpack.c.b16 %v2371, %v2367
    %v2504 = vpack.c.b16 %v2372, %v2368
    %v2505 = vpack.c.b16 %v2373, %v2369
    %v2506 = vpack.c.b16 %v2378, %v2374
    %v2507 = vpack.c.b16 %v2379, %v2375
    %v2508 = vpack.c.b16 %v2380, %v2376
    %v2509 = vpack.c.b16 %v2381, %v2377
    %2638 = vmatpush.bf16.msra.mxu0 %v2410
    %2639 = vmatpush.bf16.msra.mxu0 %v2406
    %2640 = vmatpush.bf16.msra.mxu0 %v2402
    %2641 = vmatpush.bf16.msra.mxu0 %v2398
    %2642 = vmatpush.bf16.msra.mxu0 %v2394
    %2643 = vmatpush.bf16.msra.mxu0 %v2390
    %2644 = vmatpush.bf16.msra.mxu0 %v2386
    %2645 = vmatpush.bf16.msra.mxu0 %v2382
    %2646 = vmatmul.bf16.gmra.mxu0 %v1856
    %v2647 = vpop.f32.mrf.mxu0
    %v2648 = vadd.f32 %v1990, %v2647
    %v2649 = vpop.f32.mrf.mxu0
    %v2650 = vadd.f32 %v1990, %v2649
    %2651 = vdwg.mxu0
    %2652 = vmatpush.bf16.msra.mxu0 %v2442
    %2653 = vmatpush.bf16.msra.mxu0 %v2438
    %2654 = vmatpush.bf16.msra.mxu0 %v2434
    %2655 = vmatpush.bf16.msra.mxu0 %v2430
    %2656 = vmatpush.bf16.msra.mxu0 %v2426
    %2657 = vmatpush.bf16.msra.mxu0 %v2422
    %2658 = vmatpush.bf16.msra.mxu0 %v2418
    %2659 = vmatpush.bf16.msra.mxu0 %v2414
    %2660 = vmatmul.bf16.gmra.mxu0 %v1857
    %v2661 = vpop.f32.mrf.mxu0
    %v2662 = vadd.f32 %v2648, %v2661
    %v2663 = vpop.f32.mrf.mxu0
    %v2664 = vadd.f32 %v2650, %v2663
    %2665 = vdwg.mxu0
    %2666 = vmatpush.bf16.msra.mxu0 %v2474
    %2667 = vmatpush.bf16.msra.mxu0 %v2470
    %2668 = vmatpush.bf16.msra.mxu0 %v2466
    %2669 = vmatpush.bf16.msra.mxu0 %v2462
    %2670 = vmatpush.bf16.msra.mxu0 %v2458
    %2671 = vmatpush.bf16.msra.mxu0 %v2454
    %2672 = vmatpush.bf16.msra.mxu0 %v2450
    %2673 = vmatpush.bf16.msra.mxu0 %v2446
    %2674 = vmatmul.bf16.gmra.mxu0 %v1858
    %v2675 = vpop.f32.mrf.mxu0
    %v2676 = vadd.f32 %v2662, %v2675
    %v2677 = vpop.f32.mrf.mxu0
    %v2678 = vadd.f32 %v2664, %v2677
    %2679 = vdwg.mxu0
    %2680 = vmatpush.bf16.msra.mxu0 %v2506
    %2681 = vmatpush.bf16.msra.mxu0 %v2502
    %2682 = vmatpush.bf16.msra.mxu0 %v2498
    %2683 = vmatpush.bf16.msra.mxu0 %v2494
    %2684 = vmatpush.bf16.msra.mxu0 %v2490
    %2685 = vmatpush.bf16.msra.mxu0 %v2486
    %2686 = vmatpush.bf16.msra.mxu0 %v2482
    %2687 = vmatpush.bf16.msra.mxu0 %v2478
    %2688 = vmatmul.bf16.gmra.mxu0 %v1859
    %v2689 = vpop.f32.mrf.mxu0
    %v2690 = vadd.f32 %v2676, %v2689
    %v2691 = vpop.f32.mrf.mxu0
    %v2692 = vadd.f32 %v2678, %v2691
    %2693 = vdwg.mxu0
    %2694 = vmatpush.bf16.msra.mxu0 %v2411
    %2695 = vmatpush.bf16.msra.mxu0 %v2407
    %2696 = vmatpush.bf16.msra.mxu0 %v2403
    %2697 = vmatpush.bf16.msra.mxu0 %v2399
    %2698 = vmatpush.bf16.msra.mxu0 %v2395
    %2699 = vmatpush.bf16.msra.mxu0 %v2391
    %2700 = vmatpush.bf16.msra.mxu0 %v2387
    %2701 = vmatpush.bf16.msra.mxu0 %v2383
    %2702 = vmatmul.bf16.gmra.mxu0 %v1856
    %v2703 = vpop.f32.mrf.mxu0
    %v2704 = vadd.f32 %v1991, %v2703
    %v2705 = vpop.f32.mrf.mxu0
    %v2706 = vadd.f32 %v1991, %v2705
    %2707 = vdwg.mxu0
    %2708 = vmatpush.bf16.msra.mxu0 %v2443
    %2709 = vmatpush.bf16.msra.mxu0 %v2439
    %2710 = vmatpush.bf16.msra.mxu0 %v2435
    %2711 = vmatpush.bf16.msra.mxu0 %v2431
    %2712 = vmatpush.bf16.msra.mxu0 %v2427
    %2713 = vmatpush.bf16.msra.mxu0 %v2423
    %2714 = vmatpush.bf16.msra.mxu0 %v2419
    %2715 = vmatpush.bf16.msra.mxu0 %v2415
    %2716 = vmatmul.bf16.gmra.mxu0 %v1857
    %v2717 = vpop.f32.mrf.mxu0
    %v2718 = vadd.f32 %v2704, %v2717
    %v2719 = vpop.f32.mrf.mxu0
    %v2720 = vadd.f32 %v2706, %v2719
    %2721 = vdwg.mxu0
    %2722 = vmatpush.bf16.msra.mxu0 %v2475
    %2723 = vmatpush.bf16.msra.mxu0 %v2471
    %2724 = vmatpush.bf16.msra.mxu0 %v2467
    %2725 = vmatpush.bf16.msra.mxu0 %v2463
    %2726 = vmatpush.bf16.msra.mxu0 %v2459
    %2727 = vmatpush.bf16.msra.mxu0 %v2455
    %2728 = vmatpush.bf16.msra.mxu0 %v2451
    %2729 = vmatpush.bf16.msra.mxu0 %v2447
    %2730 = vmatmul.bf16.gmra.mxu0 %v1858
    %v2731 = vpop.f32.mrf.mxu0
    %v2732 = vadd.f32 %v2718, %v2731
    %v2733 = vpop.f32.mrf.mxu0
    %v2734 = vadd.f32 %v2720, %v2733
    %2735 = vdwg.mxu0
    %2736 = vmatpush.bf16.msra.mxu0 %v2507
    %2737 = vmatpush.bf16.msra.mxu0 %v2503
    %2738 = vmatpush.bf16.msra.mxu0 %v2499
    %2739 = vmatpush.bf16.msra.mxu0 %v2495
    %2740 = vmatpush.bf16.msra.mxu0 %v2491
    %2741 = vmatpush.bf16.msra.mxu0 %v2487
    %2742 = vmatpush.bf16.msra.mxu0 %v2483
    %2743 = vmatpush.bf16.msra.mxu0 %v2479
    %2744 = vmatmul.bf16.gmra.mxu0 %v1859
    %v2745 = vpop.f32.mrf.mxu0
    %v2746 = vadd.f32 %v2732, %v2745
    %v2747 = vpop.f32.mrf.mxu0
    %v2748 = vadd.f32 %v2734, %v2747
    %2749 = vdwg.mxu0
    %2750 = vmatpush.bf16.msra.mxu0 %v2412
    %2751 = vmatpush.bf16.msra.mxu0 %v2408
    %2752 = vmatpush.bf16.msra.mxu0 %v2404
    %2753 = vmatpush.bf16.msra.mxu0 %v2400
    %2754 = vmatpush.bf16.msra.mxu0 %v2396
    %2755 = vmatpush.bf16.msra.mxu0 %v2392
    %2756 = vmatpush.bf16.msra.mxu0 %v2388
    %2757 = vmatpush.bf16.msra.mxu0 %v2384
    %2758 = vmatmul.bf16.gmra.mxu0 %v1856
    %v2759 = vpop.f32.mrf.mxu0
    %v2760 = vadd.f32 %v1992, %v2759
    %v2761 = vpop.f32.mrf.mxu0
    %v2762 = vadd.f32 %v1992, %v2761
    %2763 = vdwg.mxu0
    %2764 = vmatpush.bf16.msra.mxu0 %v2444
    %2765 = vmatpush.bf16.msra.mxu0 %v2440
    %2766 = vmatpush.bf16.msra.mxu0 %v2436
    %2767 = vmatpush.bf16.msra.mxu0 %v2432
    %2768 = vmatpush.bf16.msra.mxu0 %v2428
    %2769 = vmatpush.bf16.msra.mxu0 %v2424
    %2770 = vmatpush.bf16.msra.mxu0 %v2420
    %2771 = vmatpush.bf16.msra.mxu0 %v2416
    %2772 = vmatmul.bf16.gmra.mxu0 %v1857
    %v2773 = vpop.f32.mrf.mxu0
    %v2774 = vadd.f32 %v2760, %v2773
    %v2775 = vpop.f32.mrf.mxu0
    %v2776 = vadd.f32 %v2762, %v2775
    %2777 = vdwg.mxu0
    %2778 = vmatpush.bf16.msra.mxu0 %v2476
    %2779 = vmatpush.bf16.msra.mxu0 %v2472
    %2780 = vmatpush.bf16.msra.mxu0 %v2468
    %2781 = vmatpush.bf16.msra.mxu0 %v2464
    %2782 = vmatpush.bf16.msra.mxu0 %v2460
    %2783 = vmatpush.bf16.msra.mxu0 %v2456
    %2784 = vmatpush.bf16.msra.mxu0 %v2452
    %2785 = vmatpush.bf16.msra.mxu0 %v2448
    %2786 = vmatmul.bf16.gmra.mxu0 %v1858
    %v2787 = vpop.f32.mrf.mxu0
    %v2788 = vadd.f32 %v2774, %v2787
    %v2789 = vpop.f32.mrf.mxu0
    %v2790 = vadd.f32 %v2776, %v2789
    %2791 = vdwg.mxu0
    %2792 = vmatpush.bf16.msra.mxu0 %v2508
    %2793 = vmatpush.bf16.msra.mxu0 %v2504
    %2794 = vmatpush.bf16.msra.mxu0 %v2500
    %2795 = vmatpush.bf16.msra.mxu0 %v2496
    %2796 = vmatpush.bf16.msra.mxu0 %v2492
    %2797 = vmatpush.bf16.msra.mxu0 %v2488
    %2798 = vmatpush.bf16.msra.mxu0 %v2484
    %2799 = vmatpush.bf16.msra.mxu0 %v2480
    %2800 = vmatmul.bf16.gmra.mxu0 %v1859
    %v2801 = vpop.f32.mrf.mxu0
    %v2802 = vadd.f32 %v2788, %v2801
    %v2803 = vpop.f32.mrf.mxu0
    %v2804 = vadd.f32 %v2790, %v2803
    %2805 = vdwg.mxu0
    %2806 = vmatpush.bf16.msra.mxu0 %v2413
    %2807 = vmatpush.bf16.msra.mxu0 %v2409
    %2808 = vmatpush.bf16.msra.mxu0 %v2405
    %2809 = vmatpush.bf16.msra.mxu0 %v2401
    %2810 = vmatpush.bf16.msra.mxu0 %v2397
    %2811 = vmatpush.bf16.msra.mxu0 %v2393
    %2812 = vmatpush.bf16.msra.mxu0 %v2389
    %2813 = vmatpush.bf16.msra.mxu0 %v2385
    %2814 = vmatmul.bf16.gmra.mxu0 %v1856
    %v2815 = vpop.f32.mrf.mxu0
    %v2816 = vadd.f32 %v1993, %v2815
    %v2817 = vpop.f32.mrf.mxu0
    %v2818 = vadd.f32 %v1993, %v2817
    %2819 = vdwg.mxu0
    %2820 = vmatpush.bf16.msra.mxu0 %v2445
    %2821 = vmatpush.bf16.msra.mxu0 %v2441
    %2822 = vmatpush.bf16.msra.mxu0 %v2437
    %2823 = vmatpush.bf16.msra.mxu0 %v2433
    %2824 = vmatpush.bf16.msra.mxu0 %v2429
    %2825 = vmatpush.bf16.msra.mxu0 %v2425
    %2826 = vmatpush.bf16.msra.mxu0 %v2421
    %2827 = vmatpush.bf16.msra.mxu0 %v2417
    %2828 = vmatmul.bf16.gmra.mxu0 %v1857
    %v2829 = vpop.f32.mrf.mxu0
    %v2830 = vadd.f32 %v2816, %v2829
    %v2831 = vpop.f32.mrf.mxu0
    %v2832 = vadd.f32 %v2818, %v2831
    %2833 = vdwg.mxu0
    %2834 = vmatpush.bf16.msra.mxu0 %v2477
    %2835 = vmatpush.bf16.msra.mxu0 %v2473
    %2836 = vmatpush.bf16.msra.mxu0 %v2469
    %2837 = vmatpush.bf16.msra.mxu0 %v2465
    %2838 = vmatpush.bf16.msra.mxu0 %v2461
    %2839 = vmatpush.bf16.msra.mxu0 %v2457
    %2840 = vmatpush.bf16.msra.mxu0 %v2453
    %2841 = vmatpush.bf16.msra.mxu0 %v2449
    %2842 = vmatmul.bf16.gmra.mxu0 %v1858
    %v2843 = vpop.f32.mrf.mxu0
    %v2844 = vadd.f32 %v2830, %v2843
    %v2845 = vpop.f32.mrf.mxu0
    %v2846 = vadd.f32 %v2832, %v2845
    %2847 = vdwg.mxu0
    %2848 = vmatpush.bf16.msra.mxu0 %v2509
    %2849 = vmatpush.bf16.msra.mxu0 %v2505
    %2850 = vmatpush.bf16.msra.mxu0 %v2501
    %2851 = vmatpush.bf16.msra.mxu0 %v2497
    %2852 = vmatpush.bf16.msra.mxu0 %v2493
    %2853 = vmatpush.bf16.msra.mxu0 %v2489
    %2854 = vmatpush.bf16.msra.mxu0 %v2485
    %2855 = vmatpush.bf16.msra.mxu0 %v2481
    %2856 = vmatmul.bf16.gmra.mxu0 %v1859
    %v2857 = vpop.f32.mrf.mxu0
    %v2858 = vadd.f32 %v2844, %v2857
    %v2859 = vpop.f32.mrf.mxu0
    %v2860 = vadd.f32 %v2846, %v2859
    %2861 = vdwg.mxu0
    %v2862 = vmax.f32 %v2690, 0.0
    %v2863 = vmax.f32 %v2746, 0.0
    %v2864 = vmax.f32 %v2802, 0.0
    %v2865 = vmax.f32 %v2858, 0.0
    %v2866 = vmax.f32 %v2692, 0.0
    %v2867 = vmax.f32 %v2748, 0.0
    %v2868 = vmax.f32 %v2804, 0.0
    %v2869 = vmax.f32 %v2860, 0.0
    %v2870 = vpack.c.bf16 %v2866, %v2862
    %v2871 = vpack.c.bf16 %v2867, %v2863
    %v2872 = vpack.c.bf16 %v2868, %v2864
    %v2873 = vpack.c.bf16 %v2869, %v2865
    %v2874 = vld [vmem:[%s5] sm:$0xf]
    %v2875 = vld [vmem:[%s5 + $0x4] sm:$0xf]
    %v2876 = vld [vmem:[%s5 + $0x8] sm:$0xf]
    %v2877 = vld [vmem:[%s5 + $0xc] sm:$0xf]
    %v2878 = vld [vmem:[%s5 + $0x10] sm:$0xf]
    %v2879 = vld [vmem:[%s5 + $0x14] sm:$0xf]
    %v2880 = vld [vmem:[%s5 + $0x18] sm:$0xf]
    %v2881 = vld [vmem:[%s5 + $0x1c] sm:$0xf]
    %v2882 = vld [vmem:[%s5 + $0x20] sm:$0xf]
    %v2883 = vld [vmem:[%s5 + $0x24] sm:$0xf]
    %v2884 = vld [vmem:[%s5 + $0x28] sm:$0xf]
    %v2885 = vld [vmem:[%s5 + $0x2c] sm:$0xf]
    %v2886 = vld [vmem:[%s5 + $0x30] sm:$0xf]
    %v2887 = vld [vmem:[%s5 + $0x34] sm:$0xf]
    %v2888 = vld [vmem:[%s5 + $0x38] sm:$0xf]
    %v2889 = vld [vmem:[%s5 + $0x3c] sm:$0xf]
    %v2890 = vld [vmem:[%s5 + $0x40] sm:$0xf]
    %v2891 = vld [vmem:[%s5 + $0x44] sm:$0xf]
    %v2892 = vld [vmem:[%s5 + $0x48] sm:$0xf]
    %v2893 = vld [vmem:[%s5 + $0x4c] sm:$0xf]
    %v2894 = vld [vmem:[%s5 + $0x50] sm:$0xf]
    %v2895 = vld [vmem:[%s5 + $0x54] sm:$0xf]
    %v2896 = vld [vmem:[%s5 + $0x58] sm:$0xf]
    %v2897 = vld [vmem:[%s5 + $0x5c] sm:$0xf]
    %v2898 = vld [vmem:[%s5 + $0x60] sm:$0xf]
    %v2899 = vld [vmem:[%s5 + $0x64] sm:$0xf]
    %v2900 = vld [vmem:[%s5 + $0x68] sm:$0xf]
    %v2901 = vld [vmem:[%s5 + $0x6c] sm:$0xf]
    %v2902 = vld [vmem:[%s5 + $0x70] sm:$0xf]
    %v2903 = vld [vmem:[%s5 + $0x74] sm:$0xf]
    %v2904 = vld [vmem:[%s5 + $0x78] sm:$0xf]
    %v2905 = vld [vmem:[%s5 + $0x7c] sm:$0xf]
    %v2906 = vld [vmem:[%s5 + $0x80] sm:$0xf]
    %v2907 = vld [vmem:[%s5 + $0x84] sm:$0xf]
    %v2908 = vld [vmem:[%s5 + $0x88] sm:$0xf]
    %v2909 = vld [vmem:[%s5 + $0x8c] sm:$0xf]
    %v2910 = vld [vmem:[%s5 + $0x90] sm:$0xf]
    %v2911 = vld [vmem:[%s5 + $0x94] sm:$0xf]
    %v2912 = vld [vmem:[%s5 + $0x98] sm:$0xf]
    %v2913 = vld [vmem:[%s5 + $0x9c] sm:$0xf]
    %v2914 = vld [vmem:[%s5 + $0xa0] sm:$0xf]
    %v2915 = vld [vmem:[%s5 + $0xa4] sm:$0xf]
    %v2916 = vld [vmem:[%s5 + $0xa8] sm:$0xf]
    %v2917 = vld [vmem:[%s5 + $0xac] sm:$0xf]
    %v2918 = vld [vmem:[%s5 + $0xb0] sm:$0xf]
    %v2919 = vld [vmem:[%s5 + $0xb4] sm:$0xf]
    %v2920 = vld [vmem:[%s5 + $0xb8] sm:$0xf]
    %v2921 = vld [vmem:[%s5 + $0xbc] sm:$0xf]
    %v2922 = vld [vmem:[%s5 + $0xc0] sm:$0xf]
    %v2923 = vld [vmem:[%s5 + $0xc4] sm:$0xf]
    %v2924 = vld [vmem:[%s5 + $0xc8] sm:$0xf]
    %v2925 = vld [vmem:[%s5 + $0xcc] sm:$0xf]
    %v2926 = vld [vmem:[%s5 + $0xd0] sm:$0xf]
    %v2927 = vld [vmem:[%s5 + $0xd4] sm:$0xf]
    %v2928 = vld [vmem:[%s5 + $0xd8] sm:$0xf]
    %v2929 = vld [vmem:[%s5 + $0xdc] sm:$0xf]
    %v2930 = vld [vmem:[%s5 + $0xe0] sm:$0xf]
    %v2931 = vld [vmem:[%s5 + $0xe4] sm:$0xf]
    %v2932 = vld [vmem:[%s5 + $0xe8] sm:$0xf]
    %v2933 = vld [vmem:[%s5 + $0xec] sm:$0xf]
    %v2934 = vld [vmem:[%s5 + $0xf0] sm:$0xf]
    %v2935 = vld [vmem:[%s5 + $0xf4] sm:$0xf]
    %v2936 = vld [vmem:[%s5 + $0xf8] sm:$0xf]
    %v2937 = vld [vmem:[%s5 + $0xfc] sm:$0xf]
    %v2938 = vld [vmem:[%s6] sm:$0x1]
    %v2940 = vperm.slane %v2938, 0
    %v3006 = vunpack.c.l.b16 %v2874
    %v3007 = vunpack.c.l.b16 %v2875
    %v3008 = vunpack.c.l.b16 %v2876
    %v3009 = vunpack.c.l.b16 %v2877
    %v3010 = vunpack.c.l.b16 %v2878
    %v3011 = vunpack.c.l.b16 %v2879
    %v3012 = vunpack.c.l.b16 %v2880
    %v3013 = vunpack.c.l.b16 %v2881
    %v3014 = vunpack.c.l.b16 %v2882
    %v3015 = vunpack.c.l.b16 %v2883
    %v3016 = vunpack.c.l.b16 %v2884
    %v3017 = vunpack.c.l.b16 %v2885
    %v3018 = vunpack.c.l.b16 %v2886
    %v3019 = vunpack.c.l.b16 %v2887
    %v3020 = vunpack.c.l.b16 %v2888
    %v3021 = vunpack.c.l.b16 %v2889
    %v3022 = vunpack.c.l.b16 %v2890
    %v3023 = vunpack.c.l.b16 %v2891
    %v3024 = vunpack.c.l.b16 %v2892
    %v3025 = vunpack.c.l.b16 %v2893
    %v3026 = vunpack.c.l.b16 %v2894
    %v3027 = vunpack.c.l.b16 %v2895
    %v3028 = vunpack.c.l.b16 %v2896
    %v3029 = vunpack.c.l.b16 %v2897
    %v3030 = vunpack.c.l.b16 %v2898
    %v3031 = vunpack.c.l.b16 %v2899
    %v3032 = vunpack.c.l.b16 %v2900
    %v3033 = vunpack.c.l.b16 %v2901
    %v3034 = vunpack.c.l.b16 %v2902
    %v3035 = vunpack.c.l.b16 %v2903
    %v3036 = vunpack.c.l.b16 %v2904
    %v3037 = vunpack.c.l.b16 %v2905
    %v3038 = vunpack.c.l.b16 %v2906
    %v3039 = vunpack.c.l.b16 %v2907
    %v3040 = vunpack.c.l.b16 %v2908
    %v3041 = vunpack.c.l.b16 %v2909
    %v3042 = vunpack.c.l.b16 %v2910
    %v3043 = vunpack.c.l.b16 %v2911
    %v3044 = vunpack.c.l.b16 %v2912
    %v3045 = vunpack.c.l.b16 %v2913
    %v3046 = vunpack.c.l.b16 %v2914
    %v3047 = vunpack.c.l.b16 %v2915
    %v3048 = vunpack.c.l.b16 %v2916
    %v3049 = vunpack.c.l.b16 %v2917
    %v3050 = vunpack.c.l.b16 %v2918
    %v3051 = vunpack.c.l.b16 %v2919
    %v3052 = vunpack.c.l.b16 %v2920
    %v3053 = vunpack.c.l.b16 %v2921
    %v3054 = vunpack.c.l.b16 %v2922
    %v3055 = vunpack.c.l.b16 %v2923
    %v3056 = vunpack.c.l.b16 %v2924
    %v3057 = vunpack.c.l.b16 %v2925
    %v3058 = vunpack.c.l.b16 %v2926
    %v3059 = vunpack.c.l.b16 %v2927
    %v3060 = vunpack.c.l.b16 %v2928
    %v3061 = vunpack.c.l.b16 %v2929
    %v3062 = vunpack.c.l.b16 %v2930
    %v3063 = vunpack.c.l.b16 %v2931
    %v3064 = vunpack.c.l.b16 %v2932
    %v3065 = vunpack.c.l.b16 %v2933
    %v3066 = vunpack.c.l.b16 %v2934
    %v3067 = vunpack.c.l.b16 %v2935
    %v3068 = vunpack.c.l.b16 %v2936
    %v3069 = vunpack.c.l.b16 %v2937
    %v3070 = vpack.c.b16 %v3007, %v3006
    %v3071 = vpack.c.b16 %v3009, %v3008
    %v3072 = vpack.c.b16 %v3011, %v3010
    %v3073 = vpack.c.b16 %v3013, %v3012
    %v3074 = vpack.c.b16 %v3015, %v3014
    %v3075 = vpack.c.b16 %v3017, %v3016
    %v3076 = vpack.c.b16 %v3019, %v3018
    %v3077 = vpack.c.b16 %v3021, %v3020
    %v3078 = vpack.c.b16 %v3023, %v3022
    %v3079 = vpack.c.b16 %v3025, %v3024
    %v3080 = vpack.c.b16 %v3027, %v3026
    %v3081 = vpack.c.b16 %v3029, %v3028
    %v3082 = vpack.c.b16 %v3031, %v3030
    %v3083 = vpack.c.b16 %v3033, %v3032
    %v3084 = vpack.c.b16 %v3035, %v3034
    %v3085 = vpack.c.b16 %v3037, %v3036
    %v3086 = vpack.c.b16 %v3039, %v3038
    %v3087 = vpack.c.b16 %v3041, %v3040
    %v3088 = vpack.c.b16 %v3043, %v3042
    %v3089 = vpack.c.b16 %v3045, %v3044
    %v3090 = vpack.c.b16 %v3047, %v3046
    %v3091 = vpack.c.b16 %v3049, %v3048
    %v3092 = vpack.c.b16 %v3051, %v3050
    %v3093 = vpack.c.b16 %v3053, %v3052
    %v3094 = vpack.c.b16 %v3055, %v3054
    %v3095 = vpack.c.b16 %v3057, %v3056
    %v3096 = vpack.c.b16 %v3059, %v3058
    %v3097 = vpack.c.b16 %v3061, %v3060
    %v3098 = vpack.c.b16 %v3063, %v3062
    %v3099 = vpack.c.b16 %v3065, %v3064
    %v3100 = vpack.c.b16 %v3067, %v3066
    %v3101 = vpack.c.b16 %v3069, %v3068
    %3134 = vmatpush.bf16.msra.mxu0 %v3077
    %3135 = vmatpush.bf16.msra.mxu0 %v3076
    %3136 = vmatpush.bf16.msra.mxu0 %v3075
    %3137 = vmatpush.bf16.msra.mxu0 %v3074
    %3138 = vmatpush.bf16.msra.mxu0 %v3073
    %3139 = vmatpush.bf16.msra.mxu0 %v3072
    %3140 = vmatpush.bf16.msra.mxu0 %v3071
    %3141 = vmatpush.bf16.msra.mxu0 %v3070
    %3142 = vmatmul.bf16.gmra.mxu0 %v2870
    %v3143 = vpop.f32.mrf.mxu0
    %v3144 = vadd.f32 %v2940, %v3143
    %v3145 = vpop.f32.mrf.mxu0
    %v3146 = vadd.f32 %v2940, %v3145
    %3147 = vdwg.mxu0
    %3148 = vmatpush.bf16.msra.mxu0 %v3085
    %3149 = vmatpush.bf16.msra.mxu0 %v3084
    %3150 = vmatpush.bf16.msra.mxu0 %v3083
    %3151 = vmatpush.bf16.msra.mxu0 %v3082
    %3152 = vmatpush.bf16.msra.mxu0 %v3081
    %3153 = vmatpush.bf16.msra.mxu0 %v3080
    %3154 = vmatpush.bf16.msra.mxu0 %v3079
    %3155 = vmatpush.bf16.msra.mxu0 %v3078
    %3156 = vmatmul.bf16.gmra.mxu0 %v2871
    %v3157 = vpop.f32.mrf.mxu0
    %v3158 = vadd.f32 %v3144, %v3157
    %v3159 = vpop.f32.mrf.mxu0
    %v3160 = vadd.f32 %v3146, %v3159
    %3161 = vdwg.mxu0
    %3162 = vmatpush.bf16.msra.mxu0 %v3093
    %3163 = vmatpush.bf16.msra.mxu0 %v3092
    %3164 = vmatpush.bf16.msra.mxu0 %v3091
    %3165 = vmatpush.bf16.msra.mxu0 %v3090
    %3166 = vmatpush.bf16.msra.mxu0 %v3089
    %3167 = vmatpush.bf16.msra.mxu0 %v3088
    %3168 = vmatpush.bf16.msra.mxu0 %v3087
    %3169 = vmatpush.bf16.msra.mxu0 %v3086
    %3170 = vmatmul.bf16.gmra.mxu0 %v2872
    %v3171 = vpop.f32.mrf.mxu0
    %v3172 = vadd.f32 %v3158, %v3171
    %v3173 = vpop.f32.mrf.mxu0
    %v3174 = vadd.f32 %v3160, %v3173
    %3175 = vdwg.mxu0
    %3176 = vmatpush.bf16.msra.mxu0 %v3101
    %3177 = vmatpush.bf16.msra.mxu0 %v3100
    %3178 = vmatpush.bf16.msra.mxu0 %v3099
    %3179 = vmatpush.bf16.msra.mxu0 %v3098
    %3180 = vmatpush.bf16.msra.mxu0 %v3097
    %3181 = vmatpush.bf16.msra.mxu0 %v3096
    %3182 = vmatpush.bf16.msra.mxu0 %v3095
    %3183 = vmatpush.bf16.msra.mxu0 %v3094
    %3184 = vmatmul.bf16.gmra.mxu0 %v2873
    %v3185 = vpop.f32.mrf.mxu0
    %v3186 = vadd.f32 %v3172, %v3185
    %v3187 = vpop.f32.mrf.mxu0
    %v3188 = vadd.f32 %v3174, %v3187
    %3189 = vdwg.mxu0
    %3190 = vst [vmem:[%s7] sm:$0xff] %v3186
    %3191 = vst [vmem:[%s7 + $0x8] sm:$0xff] %v3188
    // Predicated region
    $region38: #{neural_network_forward.1} parent=1 // pred_check
      _
    $region39: #{neural_network_forward.1} parent=1 // pred_check_branch
      %3193 = sbr.rel (0) target = $region41
    $region40: #{neural_network_forward.1} parent=1 // pred_region
      _
    $region41: #{neural_network_forward.1} parent=1 // pred_fallthru
      _
    // Predicated region
    $region42: #{neural_network_forward.1} parent=1 // pred_check
      _
    $region43: #{neural_network_forward.1} parent=1 // pred_check_branch
      %3195 = sbr.rel (0) target = $region45
    $region44: #{neural_network_forward.1} parent=1 // pred_region
      _
    $region45: #{neural_network_forward.1} parent=1 // pred_fallthru
      _
    %3196 = vsyncpa [#allocation3], 1
    %3197 = vsyncpa [#allocation5], 1

</llo_original>
